<compile_context>
chip_gen: v6e
topology: v6e:2x2x1
jax: 0.10.0
libtpu: 0.0.40
codegen_flags: <defaults>
</compile_context>

<pallas_src>
import functools

import jax
import jax.numpy as jnp
from jax import lax
from jax.experimental import pallas as pl
from jax.experimental.pallas import tpu as pltpu

NEG_INF = -1.0e30  # finite sentinel used instead of -inf (same selection semantics)


def _multibox_loss_kernel(conf_ref, loc_ref, lab_ref, gt_ref,
                          mse_ref, ce_ref, npos_ref,
                          neg_col_scr,
                          *, neg_pos_ratio, col_tile):
    # One batch element per grid step; cast per tile (keeps bf16 inputs cheap on DMA).
    conf = conf_ref[0].astype(jnp.float32)        # (C, N)  classes on sublanes, priors on lanes
    loc = loc_ref[0].astype(jnp.float32)          # (4, N)
    gt = gt_ref[0].astype(jnp.float32)            # (4, N)
    labels = lab_ref[0]                           # (1, N)  int32
    C, N = conf.shape

    # ---- log-softmax over the (small) class axis ---------------------------
    m = jnp.max(conf, axis=0, keepdims=True)                           # (1, N)
    lse = jnp.log(jnp.sum(jnp.exp(conf - m), axis=0, keepdims=True)) + m
    bg_loss = lse - conf[0:1, :]                  # (1, N)  = -log p(background)

    # ---- CE per prior via iota-compare select (no f32 one-hot multiply) ----
    cls_iota = lax.broadcasted_iota(jnp.int32, (C, N), 0)
    conf_at_label = jnp.sum(jnp.where(cls_iota == labels, conf, 0.0),
                            axis=0, keepdims=True)                     # (1, N)
    ce = lse - conf_at_label                                           # (1, N)

    # ---- positives / localization (sum of squares, as in the module) -------
    pos_mask = labels > 0                                              # (1, N)
    num_pos = jnp.sum(pos_mask.astype(jnp.int32))                      # scalar
    diff = loc - gt
    sq = jnp.sum(diff * diff, axis=0, keepdims=True)                   # (1, N)
    mse_sum = jnp.sum(jnp.where(pos_mask, sq, 0.0))

    # ---- hard negative mining: blocked stable descending rank --------------
    neg_row = jnp.where(pos_mask, NEG_INF, bg_loss)                    # (1, N) lane-major
    # one O(N) relayout per batch element: sublane-major copy for column tiles
    neg_col_scr[...] = jnp.reshape(neg_row, (N, 1))

    # loop-invariant iotas for the (col_tile, N) comparison blocks (hoisted)
    i_idx = lax.broadcasted_iota(jnp.int32, (col_tile, N), 1)          # prior index i (lanes)
    j_off = lax.broadcasted_iota(jnp.int32, (col_tile, N), 0)          # offset within j tile

    n_tiles = N // col_tile

    def rank_body(jt, rank):
        j0 = pl.multiple_of(jt * col_tile, col_tile)
        lj = neg_col_scr[pl.ds(j0, col_tile), :]                       # (col_tile, 1)
        # stable descending order: j comes before i if larger, or equal with j < i
        before = (lj > neg_row) | ((lj == neg_row) & ((j_off + j0) < i_idx))
        return rank + jnp.sum(before.astype(jnp.int32), axis=0, keepdims=True)

    rank = lax.fori_loop(0, n_tiles, rank_body,
                         jnp.zeros((1, N), jnp.int32))                 # (1, N)

    num_neg = num_pos * neg_pos_ratio
    mask = pos_mask | (rank < num_neg)                                 # selected priors
    ce_sum = jnp.sum(jnp.where(mask, ce, 0.0))

    # ---- per-batch partial sums (reduced in the wrapper) --------------------
    mse_ref[...] = jnp.reshape(mse_sum, (1, 1, 1))
    ce_ref[...] = jnp.reshape(ce_sum, (1, 1, 1))
    npos_ref[...] = jnp.reshape(num_pos.astype(jnp.float32), (1, 1, 1))


class MultiboxLoss:
    """JAX/Pallas re-implementation of the PyTorch MultiboxLoss forward."""

    def __init__(self, priors, iou_threshold, neg_pos_ratio,
                 center_variance, size_variance, export_to_onnx=False):
        self.priors = priors                    # unused in forward, kept for parity
        self.iou_threshold = iou_threshold
        self.neg_pos_ratio = int(neg_pos_ratio)
        self.center_variance = center_variance
        self.size_variance = size_variance
        self.export_to_onnx = export_to_onnx

    def __call__(self, confidence, predicted_locations, labels, gt_locations):
        B, N, C = confidence.shape
        if N % 128 != 0:
            # TODO(synk): pad N to a multiple of 128 for ragged prior counts.
            raise ValueError("num_priors must be a multiple of 128 (lane-dense layout)")
        col_tile = next(t for t in (512, 256, 128) if N % t == 0)

        # Lane-dense layout: priors (N) on lanes, small C / 4 axes on sublanes.
        conf_t = jnp.transpose(confidence, (0, 2, 1))                  # (B, C, N)
        loc_t = jnp.transpose(predicted_locations, (0, 2, 1))          # (B, 4, N)
        gt_t = jnp.transpose(gt_locations, (0, 2, 1))                  # (B, 4, N)
        lab3 = labels.astype(jnp.int32).reshape(B, 1, N)               # (B, 1, N)

        kernel = functools.partial(_multibox_loss_kernel,
                                   neg_pos_ratio=self.neg_pos_ratio,
                                   col_tile=col_tile)

        # Rough VMEM budget: double-buffered input tiles + (col_tile, N)
        # comparison temporaries + row vectors.  Capped at 64 MiB (v7x).
        est = (2 * (C + 9) * N * 4
               + 6 * col_tile * N * 4
               + 4 * C * N * 4
               + 16 * N * 4)
        vmem_limit = int(min(max(est + (2 << 20), 32 << 20), 64 << 20))

        grid_spec = pltpu.PrefetchScalarGridSpec(
            num_scalar_prefetch=0,
            grid=(B,),
            in_specs=[
                pl.BlockSpec((1, C, N), lambda b: (b, 0, 0)),
                pl.BlockSpec((1, 4, N), lambda b: (b, 0, 0)),
                pl.BlockSpec((1, 1, N), lambda b: (b, 0, 0)),
                pl.BlockSpec((1, 4, N), lambda b: (b, 0, 0)),
            ],
            out_specs=[
                pl.BlockSpec((1, 1, 1), lambda b: (b, 0, 0)),
                pl.BlockSpec((1, 1, 1), lambda b: (b, 0, 0)),
                pl.BlockSpec((1, 1, 1), lambda b: (b, 0, 0)),
            ],
            scratch_shapes=[
                pltpu.VMEM((N, 1), jnp.float32),   # sublane-major neg_loss copy
            ],
        )

        mse_p, ce_p, np_p = pl.pallas_call(
            kernel,
            out_shape=(jax.ShapeDtypeStruct((B, 1, 1), jnp.float32),
                       jax.ShapeDtypeStruct((B, 1, 1), jnp.float32),
                       jax.ShapeDtypeStruct((B, 1, 1), jnp.float32)),
            grid_spec=grid_spec,
            compiler_params=pltpu.CompilerParams(
                dimension_semantics=("parallel",),
                vmem_limit_bytes=vmem_limit),
        )(conf_t, loc_t, lab3, gt_t)

        # Global num_pos, as in the PyTorch module (num_pos == 0 -> inf/nan, same as torch).
        num_pos = jnp.sum(np_p)
        return jnp.sum(mse_p) / num_pos, jnp.sum(ce_p) / num_pos


def _reference(confidence, predicted_locations, labels, gt_locations, neg_pos_ratio):
    """Pure-JAX reference mirroring the PyTorch semantics."""
    log_probs = jax.nn.log_softmax(confidence.astype(jnp.float32), axis=2)
    bg_loss = -log_probs[:, :, 0]
    pos_mask = labels > 0
    num_neg = jnp.sum(pos_mask, axis=1, keepdims=True) * neg_pos_ratio
    neg_loss = jnp.where(pos_mask, NEG_INF, bg_loss)
    B, N = neg_loss.shape
    li = neg_loss[:, :, None]
    lj = neg_loss[:, None, :]
    ii = jnp.arange(N)[None, :, None]
    jj = jnp.arange(N)[None, None, :]
    rank = jnp.sum((lj > li) | ((lj == li) & (jj < ii)), axis=2)
    mask = pos_mask | (rank < num_neg)
    C = confidence.shape[2]
    onehot = jax.nn.one_hot(labels, C, dtype=jnp.float32)
    ce = -jnp.sum(onehot * log_probs, axis=2)
    ce_sum = jnp.sum(jnp.where(mask, ce, 0.0))
    diff = predicted_locations.astype(jnp.float32) - gt_locations.astype(jnp.float32)
    mse_sum = jnp.sum(jnp.where(pos_mask, jnp.sum(diff * diff, axis=2), 0.0))
    num_pos = jnp.sum(pos_mask).astype(jnp.float32)
    return mse_sum / num_pos, ce_sum / num_pos


if __name__ == "__main__":
    key = jax.random.PRNGKey(0)
    k1, k2, k3, k4, k5 = jax.random.split(key, 5)

    B, N, C = 2, 384, 8          # batch, num_priors (multiple of 128), num_classes

    # deterministic "parameters" implied by __init__ (priors are unused in forward)
    priors = jax.random.uniform(k5, (N, 4), dtype=jnp.float32)

    confidence = jax.random.normal(k1, (B, N, C), dtype=jnp.float32)
    predicted_locations = jax.random.normal(k2, (B, N, 4), dtype=jnp.float32)
    labels = jax.random.randint(k3, (B, N), 0, C, dtype=jnp.int32)
    gt_locations = jax.random.normal(k4, (B, N, 4), dtype=jnp.float32)

    loss_fn = MultiboxLoss(priors, iou_threshold=0.5, neg_pos_ratio=3,
                           center_variance=0.1, size_variance=0.2,
                           export_to_onnx=False)

    mse_loss, cls_loss = loss_fn(confidence, predicted_locations, labels, gt_locations)
    jax.block_until_ready((mse_loss, cls_loss))

    ref_mse, ref_cls = _reference(confidence, predicted_locations, labels,
                                  gt_locations, neg_pos_ratio=3)
    assert jnp.allclose(mse_loss, ref_mse, rtol=1e-3, atol=1e-3), (mse_loss, ref_mse)
    assert jnp.allclose(cls_loss, ref_cls, rtol=1e-3, atol=1e-3), (cls_loss, ref_cls)

    print("KERNEL_OK")
</pallas_src>

<mosaic_0001>
module attributes {stable_mosaic.version = 11 : i64} {
  func.func @_multibox_loss_kernel(%arg0: i32, %arg1: memref<1x8x384xf32, #tpu.memory_space<vmem>>, %arg2: memref<1x4x384xf32, #tpu.memory_space<vmem>>, %arg3: memref<1x1x384xi32, #tpu.memory_space<vmem>>, %arg4: memref<1x4x384xf32, #tpu.memory_space<vmem>>, %arg5: memref<1x1x1xf32, #tpu.memory_space<vmem>>, %arg6: memref<1x1x1xf32, #tpu.memory_space<vmem>>, %arg7: memref<1x1x1xf32, #tpu.memory_space<vmem>>, %arg8: memref<384x1xf32, #tpu.memory_space<vmem>>) attributes {dimension_semantics = [#tpu.dimension_semantics<parallel>], iteration_bounds = array<i64: 2>, scalar_prefetch = 0 : i64, scratch_operands = 1 : i64, tpu.core_type = #tpu.core_type<tc>, window_params = [{transform_indices = @transform_0, window_bounds = array<i64: 1, 8, 384>}, {transform_indices = @transform_1, window_bounds = array<i64: 1, 4, 384>}, {transform_indices = @transform_2, window_bounds = array<i64: 1, 1, 384>}, {transform_indices = @transform_3, window_bounds = array<i64: 1, 4, 384>}, {transform_indices = @transform_4, window_bounds = array<i64: 1, 1, 1>}, {transform_indices = @transform_5, window_bounds = array<i64: 1, 1, 1>}, {transform_indices = @transform_6, window_bounds = array<i64: 1, 1, 1>}]} {
    %c0 = arith.constant 0 : index
    %c0_0 = arith.constant 0 : index
    %c0_1 = arith.constant 0 : index
    %0 = vector.load %arg1[%c0, %c0_0, %c0_1] : memref<1x8x384xf32, #tpu.memory_space<vmem>>, vector<1x8x384xf32>
    %1 = vector.shape_cast %0 : vector<1x8x384xf32> to vector<8x384xf32>
    %c0_2 = arith.constant 0 : index
    %c0_3 = arith.constant 0 : index
    %c0_4 = arith.constant 0 : index
    %2 = vector.load %arg2[%c0_2, %c0_3, %c0_4] : memref<1x4x384xf32, #tpu.memory_space<vmem>>, vector<1x4x384xf32>
    %3 = vector.shape_cast %2 : vector<1x4x384xf32> to vector<4x384xf32>
    %c0_5 = arith.constant 0 : index
    %c0_6 = arith.constant 0 : index
    %c0_7 = arith.constant 0 : index
    %4 = vector.load %arg4[%c0_5, %c0_6, %c0_7] : memref<1x4x384xf32, #tpu.memory_space<vmem>>, vector<1x4x384xf32>
    %5 = vector.shape_cast %4 : vector<1x4x384xf32> to vector<4x384xf32>
    %c0_8 = arith.constant 0 : index
    %c0_9 = arith.constant 0 : index
    %c0_10 = arith.constant 0 : index
    %6 = vector.load %arg3[%c0_8, %c0_9, %c0_10] : memref<1x1x384xi32, #tpu.memory_space<vmem>>, vector<1x1x384xi32>
    %7 = vector.shape_cast %6 : vector<1x1x384xi32> to vector<1x384xi32>
    %cst = arith.constant dense<0xFF800000> : vector<384xf32>
    %8 = vector.multi_reduction <maximumf>, %1, %cst [0] : vector<8x384xf32> to vector<384xf32>
    %9 = vector.shape_cast %8 : vector<384xf32> to vector<1x384xf32>
    %10 = vector.broadcast %9 : vector<1x384xf32> to vector<8x384xf32>
    %11 = arith.subf %1, %10 : vector<8x384xf32>
    %12 = math.exp %11 : vector<8x384xf32>
    %cst_11 = arith.constant dense<0.000000e+00> : vector<384xf32>
    %13 = vector.multi_reduction <add>, %12, %cst_11 [0] : vector<8x384xf32> to vector<384xf32>
    %14 = vector.shape_cast %13 : vector<384xf32> to vector<1x384xf32>
    %15 = math.log %14 : vector<1x384xf32>
    %16 = arith.addf %15, %9 : vector<1x384xf32>
    %17 = vector.extract_strided_slice %1 {offsets = [0, 0], sizes = [1, 384], strides = [1, 1]} : vector<8x384xf32> to vector<1x384xf32>
    %18 = arith.subf %16, %17 : vector<1x384xf32>
    %19 = tpu.iota {dimensions = array<i32: 0>} : vector<8x384xi32>
    %20 = vector.broadcast %7 : vector<1x384xi32> to vector<8x384xi32>
    %21 = arith.cmpi eq, %19, %20 : vector<8x384xi32>
    %cst_12 = arith.constant 0.000000e+00 : f32
    %22 = vector.broadcast %cst_12 : f32 to vector<8x384xf32>
    %23 = arith.select %21, %1, %22 : vector<8x384xi1>, vector<8x384xf32>
    %cst_13 = arith.constant dense<0.000000e+00> : vector<384xf32>
    %24 = vector.multi_reduction <add>, %23, %cst_13 [0] : vector<8x384xf32> to vector<384xf32>
    %25 = vector.shape_cast %24 : vector<384xf32> to vector<1x384xf32>
    %26 = arith.subf %16, %25 : vector<1x384xf32>
    %c0_i32 = arith.constant 0 : i32
    %27 = vector.broadcast %c0_i32 : i32 to vector<1x384xi32>
    %28 = arith.cmpi sgt, %7, %27 : vector<1x384xi32>
    %29 = arith.extui %28 : vector<1x384xi1> to vector<1x384xi32>
    %30 = vector.shape_cast %29 : vector<1x384xi32> to vector<1x1x384xi32>
    %cst_14 = arith.constant dense<0> : vector<1xi32>
    %31 = vector.multi_reduction <add>, %30, %cst_14 [1, 2] : vector<1x1x384xi32> to vector<1xi32>
    %32 = vector.shape_cast %31 : vector<1xi32> to vector<1x1x1xi32>
    %33 = vector.extract %32[0, 0, 0] : i32 from vector<1x1x1xi32>
    %34 = arith.subf %3, %5 : vector<4x384xf32>
    %35 = arith.mulf %34, %34 : vector<4x384xf32>
    %cst_15 = arith.constant dense<0.000000e+00> : vector<384xf32>
    %36 = vector.multi_reduction <add>, %35, %cst_15 [0] : vector<4x384xf32> to vector<384xf32>
    %37 = vector.shape_cast %36 : vector<384xf32> to vector<1x384xf32>
    %cst_16 = arith.constant 0.000000e+00 : f32
    %38 = vector.broadcast %cst_16 : f32 to vector<1x384xf32>
    %39 = arith.select %28, %37, %38 : vector<1x384xi1>, vector<1x384xf32>
    %40 = vector.shape_cast %39 : vector<1x384xf32> to vector<1x1x384xf32>
    %cst_17 = arith.constant dense<0.000000e+00> : vector<1xf32>
    %41 = vector.multi_reduction <add>, %40, %cst_17 [1, 2] : vector<1x1x384xf32> to vector<1xf32>
    %42 = vector.shape_cast %41 : vector<1xf32> to vector<1x1x1xf32>
    %43 = vector.extract %42[0, 0, 0] : f32 from vector<1x1x1xf32>
    %cst_18 = arith.constant -1.000000e+30 : f32
    %44 = vector.broadcast %cst_18 : f32 to vector<1x384xf32>
    %45 = arith.select %28, %44, %18 : vector<1x384xi1>, vector<1x384xf32>
    %46 = vector.shape_cast %45 : vector<1x384xf32> to vector<384x1xf32>
    %c0_19 = arith.constant 0 : index
    %c0_20 = arith.constant 0 : index
    %47 = vector.load %arg8[%c0_19, %c0_20] : memref<384x1xf32, #tpu.memory_space<vmem>>, vector<384x1xf32>
    tpu.vector_store %arg8[%c0_19, %c0_20], %46 {strides = array<i32>} : memref<384x1xf32, #tpu.memory_space<vmem>>, vector<384x1xf32>,
    %48 = tpu.iota {dimensions = array<i32: 1>} : vector<128x384xi32>
    %49 = tpu.iota {dimensions = array<i32: 0>} : vector<128x384xi32>
    %c0_i32_21 = arith.constant 0 : i32
    %50 = vector.broadcast %c0_i32_21 : i32 to vector<1x384xi32>
    %c0_i32_22 = arith.constant 0 : i32
    %c3_i32 = arith.constant 3 : i32
    %51 = arith.addi %c0_i32_22, %c3_i32 : i32
    %c1_i32 = arith.constant 1 : i32
    %52 = scf.for %arg9 = %c0_i32_22 to %51 step %c1_i32 iter_args(%arg10 = %50) -> (vector<1x384xi32>)  : i32 {
      %c128_i32 = arith.constant 128 : i32
      %70 = arith.muli %arg9, %c128_i32 : i32
      %71 = tpu.assume_multiple %70, 128 : i32
      %72 = arith.index_cast %71 : i32 to index
      %c0_36 = arith.constant 0 : index
      %73 = vector.load %arg8[%72, %c0_36] : memref<384x1xf32, #tpu.memory_space<vmem>>, vector<128x1xf32>
      %74 = vector.broadcast %73 : vector<128x1xf32> to vector<128x384xf32>
      %75 = vector.broadcast %45 : vector<1x384xf32> to vector<128x384xf32>
      %76 = arith.cmpf ogt, %74, %75 : vector<128x384xf32>
      %77 = vector.broadcast %73 : vector<128x1xf32> to vector<128x384xf32>
      %78 = vector.broadcast %45 : vector<1x384xf32> to vector<128x384xf32>
      %79 = arith.cmpf oeq, %77, %78 : vector<128x384xf32>
      %80 = vector.broadcast %71 : i32 to vector<128x384xi32>
      %81 = arith.addi %49, %80 : vector<128x384xi32>
      %82 = arith.cmpi slt, %81, %48 : vector<128x384xi32>
      %83 = arith.andi %79, %82 : vector<128x384xi1>
      %84 = arith.ori %76, %83 : vector<128x384xi1>
      %85 = arith.extui %84 : vector<128x384xi1> to vector<128x384xi32>
      %cst_37 = arith.constant dense<0> : vector<384xi32>
      %86 = vector.multi_reduction <add>, %85, %cst_37 [0] : vector<128x384xi32> to vector<384xi32>
      %87 = vector.shape_cast %86 : vector<384xi32> to vector<1x384xi32>
      %88 = arith.addi %arg10, %87 : vector<1x384xi32>
      scf.yield %88 : vector<1x384xi32>
    }
    %c3_i32_23 = arith.constant 3 : i32
    %c3_i32_24 = arith.constant 3 : i32
    %53 = arith.muli %33, %c3_i32_24 : i32
    %54 = vector.broadcast %53 : i32 to vector<1x384xi32>
    %55 = arith.cmpi slt, %52, %54 : vector<1x384xi32>
    %56 = arith.ori %28, %55 : vector<1x384xi1>
    %cst_25 = arith.constant 0.000000e+00 : f32
    %57 = vector.broadcast %cst_25 : f32 to vector<1x384xf32>
    %58 = arith.select %56, %26, %57 : vector<1x384xi1>, vector<1x384xf32>
    %59 = vector.shape_cast %58 : vector<1x384xf32> to vector<1x1x384xf32>
    %cst_26 = arith.constant dense<0.000000e+00> : vector<1xf32>
    %60 = vector.multi_reduction <add>, %59, %cst_26 [1, 2] : vector<1x1x384xf32> to vector<1xf32>
    %61 = vector.shape_cast %60 : vector<1xf32> to vector<1x1x1xf32>
    %62 = vector.extract %61[0, 0, 0] : f32 from vector<1x1x1xf32>
    %63 = vector.broadcast %43 : f32 to vector<1x1x1xf32>
    %c0_27 = arith.constant 0 : index
    %c0_28 = arith.constant 0 : index
    %c0_29 = arith.constant 0 : index
    %64 = vector.load %arg5[%c0_27, %c0_28, %c0_29] : memref<1x1x1xf32, #tpu.memory_space<vmem>>, vector<1x1x1xf32>
    tpu.vector_store %arg5[%c0_27, %c0_28, %c0_29], %63 {strides = array<i32>} : memref<1x1x1xf32, #tpu.memory_space<vmem>>, vector<1x1x1xf32>,
    %65 = vector.broadcast %62 : f32 to vector<1x1x1xf32>
    %c0_30 = arith.constant 0 : index
    %c0_31 = arith.constant 0 : index
    %c0_32 = arith.constant 0 : index
    %66 = vector.load %arg6[%c0_30, %c0_31, %c0_32] : memref<1x1x1xf32, #tpu.memory_space<vmem>>, vector<1x1x1xf32>
    tpu.vector_store %arg6[%c0_30, %c0_31, %c0_32], %65 {strides = array<i32>} : memref<1x1x1xf32, #tpu.memory_space<vmem>>, vector<1x1x1xf32>,
    %67 = arith.sitofp %33 : i32 to f32
    %68 = vector.broadcast %67 : f32 to vector<1x1x1xf32>
    %c0_33 = arith.constant 0 : index
    %c0_34 = arith.constant 0 : index
    %c0_35 = arith.constant 0 : index
    %69 = vector.load %arg7[%c0_33, %c0_34, %c0_35] : memref<1x1x1xf32, #tpu.memory_space<vmem>>, vector<1x1x1xf32>
    tpu.vector_store %arg7[%c0_33, %c0_34, %c0_35], %68 {strides = array<i32>} : memref<1x1x1xf32, #tpu.memory_space<vmem>>, vector<1x1x1xf32>,
    return
  }
  func.func @transform_0(%arg0: i32) -> (i32, i32, i32) {
    %c0_i32 = arith.constant 0 : i32
    %c0_i32_0 = arith.constant 0 : i32
    %c0_i32_1 = arith.constant 0 : i32
    return %arg0, %c0_i32, %c0_i32_0 : i32, i32, i32
  }
  func.func @transform_1(%arg0: i32) -> (i32, i32, i32) {
    %c0_i32 = arith.constant 0 : i32
    %c0_i32_0 = arith.constant 0 : i32
    %c0_i32_1 = arith.constant 0 : i32
    return %arg0, %c0_i32, %c0_i32_0 : i32, i32, i32
  }
  func.func @transform_2(%arg0: i32) -> (i32, i32, i32) {
    %c0_i32 = arith.constant 0 : i32
    %c0_i32_0 = arith.constant 0 : i32
    %c0_i32_1 = arith.constant 0 : i32
    return %arg0, %c0_i32, %c0_i32_0 : i32, i32, i32
  }
  func.func @transform_3(%arg0: i32) -> (i32, i32, i32) {
    %c0_i32 = arith.constant 0 : i32
    %c0_i32_0 = arith.constant 0 : i32
    %c0_i32_1 = arith.constant 0 : i32
    return %arg0, %c0_i32, %c0_i32_0 : i32, i32, i32
  }
  func.func @transform_4(%arg0: i32) -> (i32, i32, i32) {
    %c0_i32 = arith.constant 0 : i32
    %c0_i32_0 = arith.constant 0 : i32
    %c0_i32_1 = arith.constant 0 : i32
    return %arg0, %c0_i32, %c0_i32_0 : i32, i32, i32
  }
  func.func @transform_5(%arg0: i32) -> (i32, i32, i32) {
    %c0_i32 = arith.constant 0 : i32
    %c0_i32_0 = arith.constant 0 : i32
    %c0_i32_1 = arith.constant 0 : i32
    return %arg0, %c0_i32, %c0_i32_0 : i32, i32, i32
  }
  func.func @transform_6(%arg0: i32) -> (i32, i32, i32) {
    %c0_i32 = arith.constant 0 : i32
    %c0_i32_0 = arith.constant 0 : i32
    %c0_i32_1 = arith.constant 0 : i32
    return %arg0, %c0_i32, %c0_i32_0 : i32, i32, i32
  }
}

</mosaic_0001>

<llo_original>
// kernel: tpu_custom_call.1
$region0: #{tpu_custom_call.1}
  #allocation0 [shape = 'u32[]', space=smem, size = 0x4, offset = 0x4, fixed_abs, tag = 'smem constant byte address 0x4 - core index']
  #allocation1 [shape = 'u32[144,128]{1,0:T(1,128)}', space=vmem, size = 0x12000, scoped, tag = 'internal scratch']
  #allocation2 [shape = 'f32[384,1]{1,0:T(8,128)}', space=vmem, size = 0x30000, scoped, tag = 'scratch operand']
  %s0 = inlined_call_operand.hbm [shape: f32[2,8,384], index: 0, kind: input, shape index: {}]
  %s1 = inlined_call_operand.hbm [shape: f32[2,4,384], index: 1, kind: input, shape index: {}]
  %s2 = inlined_call_operand.hbm [shape: s32[2,1,384], index: 2, kind: input, shape index: {}]
  %s3 = inlined_call_operand.hbm [shape: f32[2,4,384], index: 3, kind: input, shape index: {}]
  %s4 = inlined_call_operand.vmem [shape: f32[2,1,1], index: 4, kind: output, shape index: {0}]
  %s5 = inlined_call_operand.vmem [shape: f32[2,1,1], index: 5, kind: output, shape index: {1}]
  %s6 = inlined_call_operand.vmem [shape: f32[2,1,1], index: 6, kind: output, shape index: {2}]
  %7 = xla_tuple %s4, %s5, %s6
  %s8 = sld [smem:[#allocation0]]
  $region88: #{tpu_custom_call.1} parent=0
    _
  %s10 = ssub.s32 1, %s8
  %s11 = scalar_select 0, %s10, %s8
  $region1: #{tpu_custom_call.1} parent=0
    #allocation3 [shape = 'u8[24576]{0}', space=vmem, size = 0x6000, scoped, tag = 'input window, operand 0']
    #allocation4 [shape = 's32[2]{0}', space=sflag, size = 0x8, scoped, tag = 'scoped memory for tpu_custom_call.1']
    #allocation5 [shape = 'u8[12288]{0}', space=vmem, size = 0x3000, scoped, tag = 'input window, operand 1']
    #allocation6 [shape = 's32[2]{0}', space=sflag, size = 0x8, scoped, tag = 'scoped memory for tpu_custom_call.1']
    #allocation7 [shape = 'u8[3072]{0}', space=vmem, size = 0xc00, scoped, tag = 'input window, operand 2']
    #allocation8 [shape = 'u8[12288]{0}', space=vmem, size = 0x3000, scoped, tag = 'input window, operand 3']
    #allocation9 [shape = 's32[2]{0}', space=sflag, size = 0x8, scoped, tag = 'scoped memory for tpu_custom_call.1']
    %12 = vsyncpa [#allocation4], 0
    %s13 = scalar_lea.sflag [#allocation4], 1
    %14 = vsyncpa %s13, 0
    %15 = vsyncpa [#allocation6], 0
    %s16 = scalar_lea.sflag [#allocation6], 1
    %17 = vsyncpa %s16, 0
    %18 = vsyncpa [#allocation9], 0
    %s19 = scalar_lea.sflag [#allocation9], 1
    %20 = vsyncpa %s19, 0
    loop: start=0, step=1, limit=4
    $region2: #{tpu_custom_call.1} parent=1 // loop_pre_header
      _
    $region3: #{tpu_custom_call.1} parent=1 // loop_header
      %s22 = sphi 0, %s26
      %p23 = scmp.ge.s32.totalorder %s22, 4
      %s32 = sphi 0, %s34
      %s35 = sphi 0, %s32
      %s36 = sphi 0, %s35
      %s52 = sphi 0, %s36
      %s58 = sphi 0, %s60
      %s61 = sphi 0, %s58
      %s62 = sphi 0, %s61
      %s78 = sphi 0, %s62
      %s84 = sphi 0, %s86
      %s87 = sphi 0, %s84
      %s88 = sphi 0, %s87
      %s104 = sphi 0, %s88
      %s110 = sphi 0, %s112
      %s113 = sphi 0, %s110
      %s114 = sphi 0, %s113
      %s130 = sphi 0, %s114
      %s136 = sphi 0, %s138
      %s139 = sphi 0, %s136
      %s140 = sphi 0, %s139
      %s156 = sphi 0, %s140
      %s162 = sphi 0, %s164
      %s165 = sphi 0, %s162
      %s166 = sphi 0, %s165
      %s182 = sphi 0, %s166
      %s188 = sphi 0, %s190
      %s191 = sphi 0, %s188
      %s192 = sphi 0, %s191
      %s208 = sphi 0, %s192
    $region4: #{tpu_custom_call.1} parent=1 // loop_header_branch
      %25 = sbr.rel (%p23) target = $region8
    $region5: #{tpu_custom_call.1} parent=1 // loop_body
      %s27 = ssub.s32 %s22, 1
      %s28 = ssub.s32 %s22, 2
      %s29 = sadd.s32 %s22, 1
      %s30 = ssub.s32 %s22, %s29
      %p31 = scmp.eq.s32.totalorder %s30, 0
      %s33 = sadd.s32 %s32, 1
      %s34 = scalar_select %p31, %s32, %s33
      %p37 = pneg %p31
      %p38 = scmp.eq.s32.totalorder %s22, 1
      %p39 = por %p37, %p38
      %p40 = scmp.ne.s32.totalorder %s32, %s35
      %p41 = scmp.eq.s32.totalorder %s22, 0
      %p42 = por %p40, %p41
      %p43 = scmp.ne.s32.totalorder %s32, %s35
      %p44 = scmp.eq.s32.totalorder %s27, 1
      %p45 = por %p43, %p44
      %p46 = scmp.ne.s32.totalorder %s35, %s36
      %p47 = scmp.eq.s32.totalorder %s27, 0
      %p48 = por %p46, %p47
      %p49 = scmp.ne.s32.totalorder %s35, %s36
      %p50 = scmp.eq.s32.totalorder %s28, 1
      %p51 = por %p49, %p50
      %p53 = scmp.ne.s32.totalorder %s36, %s52
      %p54 = scmp.eq.s32.totalorder %s28, 0
      %p55 = por %p53, %p54
      %s56 = ssub.s32 %s22, %s29
      %p57 = scmp.eq.s32.totalorder %s56, 0
      %s59 = sadd.s32 %s58, 1
      %s60 = scalar_select %p57, %s58, %s59
      %p63 = pneg %p57
      %p64 = scmp.eq.s32.totalorder %s22, 1
      %p65 = por %p63, %p64
      %p66 = scmp.ne.s32.totalorder %s58, %s61
      %p67 = scmp.eq.s32.totalorder %s22, 0
      %p68 = por %p66, %p67
      %p69 = scmp.ne.s32.totalorder %s58, %s61
      %p70 = scmp.eq.s32.totalorder %s27, 1
      %p71 = por %p69, %p70
      %p72 = scmp.ne.s32.totalorder %s61, %s62
      %p73 = scmp.eq.s32.totalorder %s27, 0
      %p74 = por %p72, %p73
      %p75 = scmp.ne.s32.totalorder %s61, %s62
      %p76 = scmp.eq.s32.totalorder %s28, 1
      %p77 = por %p75, %p76
      %p79 = scmp.ne.s32.totalorder %s62, %s78
      %p80 = scmp.eq.s32.totalorder %s28, 0
      %p81 = por %p79, %p80
      %s82 = ssub.s32 %s22, %s29
      %p83 = scmp.eq.s32.totalorder %s82, 0
      %s85 = sadd.s32 %s84, 1
      %s86 = scalar_select %p83, %s84, %s85
      %p89 = pneg %p83
      %p90 = scmp.eq.s32.totalorder %s22, 1
      %p91 = por %p89, %p90
      %p92 = scmp.ne.s32.totalorder %s84, %s87
      %p93 = scmp.eq.s32.totalorder %s22, 0
      %p94 = por %p92, %p93
      %p95 = scmp.ne.s32.totalorder %s84, %s87
      %p96 = scmp.eq.s32.totalorder %s27, 1
      %p97 = por %p95, %p96
      %p98 = scmp.ne.s32.totalorder %s87, %s88
      %p99 = scmp.eq.s32.totalorder %s27, 0
      %p100 = por %p98, %p99
      %p101 = scmp.ne.s32.totalorder %s87, %s88
      %p102 = scmp.eq.s32.totalorder %s28, 1
      %p103 = por %p101, %p102
      %p105 = scmp.ne.s32.totalorder %s88, %s104
      %p106 = scmp.eq.s32.totalorder %s28, 0
      %p107 = por %p105, %p106
      %s108 = ssub.s32 %s22, %s29
      %p109 = scmp.eq.s32.totalorder %s108, 0
      %s111 = sadd.s32 %s110, 1
      %s112 = scalar_select %p109, %s110, %s111
      %p115 = pneg %p109
      %p116 = scmp.eq.s32.totalorder %s22, 1
      %p117 = por %p115, %p116
      %p118 = scmp.ne.s32.totalorder %s110, %s113
      %p119 = scmp.eq.s32.totalorder %s22, 0
      %p120 = por %p118, %p119
      %p121 = scmp.ne.s32.totalorder %s110, %s113
      %p122 = scmp.eq.s32.totalorder %s27, 1
      %p123 = por %p121, %p122
      %p124 = scmp.ne.s32.totalorder %s113, %s114
      %p125 = scmp.eq.s32.totalorder %s27, 0
      %p126 = por %p124, %p125
      %p127 = scmp.ne.s32.totalorder %s113, %s114
      %p128 = scmp.eq.s32.totalorder %s28, 1
      %p129 = por %p127, %p128
      %p131 = scmp.ne.s32.totalorder %s114, %s130
      %p132 = scmp.eq.s32.totalorder %s28, 0
      %p133 = por %p131, %p132
      %s134 = ssub.s32 %s22, %s29
      %p135 = scmp.eq.s32.totalorder %s134, 0
      %s137 = sadd.s32 %s136, 1
      %s138 = scalar_select %p135, %s136, %s137
      %p141 = pneg %p135
      %p142 = scmp.eq.s32.totalorder %s22, 1
      %p143 = por %p141, %p142
      %p144 = scmp.ne.s32.totalorder %s136, %s139
      %p145 = scmp.eq.s32.totalorder %s22, 0
      %p146 = por %p144, %p145
      %p147 = scmp.ne.s32.totalorder %s136, %s139
      %p148 = scmp.eq.s32.totalorder %s27, 1
      %p149 = por %p147, %p148
      %p150 = scmp.ne.s32.totalorder %s139, %s140
      %p151 = scmp.eq.s32.totalorder %s27, 0
      %p152 = por %p150, %p151
      %p153 = scmp.ne.s32.totalorder %s139, %s140
      %p154 = scmp.eq.s32.totalorder %s28, 1
      %p155 = por %p153, %p154
      %p157 = scmp.ne.s32.totalorder %s140, %s156
      %p158 = scmp.eq.s32.totalorder %s28, 0
      %p159 = por %p157, %p158
      %s160 = ssub.s32 %s22, %s29
      %p161 = scmp.eq.s32.totalorder %s160, 0
      %s163 = sadd.s32 %s162, 1
      %s164 = scalar_select %p161, %s162, %s163
      %p167 = pneg %p161
      %p168 = scmp.eq.s32.totalorder %s22, 1
      %p169 = por %p167, %p168
      %p170 = scmp.ne.s32.totalorder %s162, %s165
      %p171 = scmp.eq.s32.totalorder %s22, 0
      %p172 = por %p170, %p171
      %p173 = scmp.ne.s32.totalorder %s162, %s165
      %p174 = scmp.eq.s32.totalorder %s27, 1
      %p175 = por %p173, %p174
      %p176 = scmp.ne.s32.totalorder %s165, %s166
      %p177 = scmp.eq.s32.totalorder %s27, 0
      %p178 = por %p176, %p177
      %p179 = scmp.ne.s32.totalorder %s165, %s166
      %p180 = scmp.eq.s32.totalorder %s28, 1
      %p181 = por %p179, %p180
      %p183 = scmp.ne.s32.totalorder %s166, %s182
      %p184 = scmp.eq.s32.totalorder %s28, 0
      %p185 = por %p183, %p184
      %s186 = ssub.s32 %s22, %s29
      %p187 = scmp.eq.s32.totalorder %s186, 0
      %s189 = sadd.s32 %s188, 1
      %s190 = scalar_select %p187, %s188, %s189
      %p193 = pneg %p187
      %p194 = scmp.eq.s32.totalorder %s22, 1
      %p195 = por %p193, %p194
      %p196 = scmp.ne.s32.totalorder %s188, %s191
      %p197 = scmp.eq.s32.totalorder %s22, 0
      %p198 = por %p196, %p197
      %p199 = scmp.ne.s32.totalorder %s188, %s191
      %p200 = scmp.eq.s32.totalorder %s27, 1
      %p201 = por %p199, %p200
      %p202 = scmp.ne.s32.totalorder %s191, %s192
      %p203 = scmp.eq.s32.totalorder %s27, 0
      %p204 = por %p202, %p203
      %p205 = scmp.ne.s32.totalorder %s191, %s192
      %p206 = scmp.eq.s32.totalorder %s28, 1
      %p207 = por %p205, %p206
      %p209 = scmp.ne.s32.totalorder %s192, %s208
      %p210 = scmp.eq.s32.totalorder %s28, 0
      %p211 = por %p209, %p210
      %p212 = scmp.le.s32.totalorder 1, %s22
      %p213 = scmp.lt.s32.totalorder %s22, 3
      %p214 = pnand %p212, %p213
      %p215 = pneg %p214
      // Predicated region
      $region9: #{tpu_custom_call.1} parent=5 // pred_check
        _
      $region10: #{tpu_custom_call.1} parent=5 // pred_check_branch
        %217 = sbr.rel (%p214) target = $region12
      $region11: #{tpu_custom_call.1} parent=5 // pred_region
        %s218 = ssub.s32 %s22, 1
      $region12: #{tpu_custom_call.1} parent=5 // pred_fallthru
        _
      %p219 = scmp.lt.s32.totalorder %s22, 2
      // Predicated region
      $region13: #{tpu_custom_call.1} parent=5 // pred_check
        %p220 = pneg %p219
      $region14: #{tpu_custom_call.1} parent=5 // pred_check_branch
        %222 = sbr.rel (%p220) target = $region16
      $region15: #{tpu_custom_call.1} parent=5 // pred_region
        // Predicated region
        $region17: #{tpu_custom_call.1} parent=15 // pred_check
          %p223 = pneg %p42
        $region18: #{tpu_custom_call.1} parent=15 // pred_check_branch
          %225 = sbr.rel (%p223) target = $region20
        $region19: #{tpu_custom_call.1} parent=15 // pred_region
          %s226 = sand.u32 %s32, 1
          %s227 = scalar_lea.sflag [#allocation4], %s226
          %s228 = sand.u32 %s32, 1
          %s229 = smul.addr %s228, 24
          %s230 = scalar_lea.vmem [#allocation3], %s229
          %s232 = ssub.s32 384, 384
          %233 = vsyncadd %s227, %s232
          %s234 = smul.addr %s22, 3
          %s235 = smul.addr %s234, 128
          %s236 = scalar_lea.hbm %s0, %s235
          %s238 = sshll.u32 %s230, 4
          %s239 = int_to_ptr.vmem [resolvable:$true] %s238
          %241 = dma.hbm_to_vmem [thread:$0]  %s236, 384, %s239, %s227
        $region20: #{tpu_custom_call.1} parent=15 // pred_fallthru
          _
        // Predicated region
        $region21: #{tpu_custom_call.1} parent=15 // pred_check
          %p242 = pneg %p68
        $region22: #{tpu_custom_call.1} parent=15 // pred_check_branch
          %244 = sbr.rel (%p242) target = $region24
        $region23: #{tpu_custom_call.1} parent=15 // pred_region
          %s245 = sand.u32 %s22, 1
          %s246 = scalar_lea.sflag [#allocation6], %s245
          %s247 = sand.u32 %s58, 1
          %s248 = smul.addr %s247, 12
          %s249 = scalar_lea.vmem [#allocation5], %s248
          %s251 = ssub.s32 192, 192
          %252 = vsyncadd %s246, %s251
          %s253 = smul.addr %s22, 3
          %s254 = smul.addr %s253, 64
          %s255 = scalar_lea.hbm %s1, %s254
          %s257 = sshll.u32 %s249, 4
          %s258 = int_to_ptr.vmem [resolvable:$true] %s257
          %260 = dma.hbm_to_vmem [thread:$0]  %s255, 192, %s258, %s246
        $region24: #{tpu_custom_call.1} parent=15 // pred_fallthru
          _
        // Predicated region
        $region25: #{tpu_custom_call.1} parent=15 // pred_check
          %p261 = pneg %p94
        $region26: #{tpu_custom_call.1} parent=15 // pred_check_branch
          %263 = sbr.rel (%p261) target = $region28
        $region27: #{tpu_custom_call.1} parent=15 // pred_region
          %s264 = sand.u32 %s22, 1
          %s265 = scalar_lea.sflag [#allocation6], %s264
          %s266 = sand.u32 %s84, 1
          %s267 = smul.addr %s266, 3
          %s268 = scalar_lea.vmem [#allocation7], %s267
          %s270 = ssub.s32 48, 48
          %271 = vsyncadd %s265, %s270
          %s272 = smul.addr %s22, 3
          %s273 = smul.addr %s272, 16
          %s274 = scalar_lea.hbm %s2, %s273
          %s276 = sshll.u32 %s268, 4
          %s277 = int_to_ptr.vmem [resolvable:$true] %s276
          %279 = dma.hbm_to_vmem [thread:$0]  %s274, 48, %s277, %s265
        $region28: #{tpu_custom_call.1} parent=15 // pred_fallthru
          _
        // Predicated region
        $region29: #{tpu_custom_call.1} parent=15 // pred_check
          %p280 = pneg %p120
        $region30: #{tpu_custom_call.1} parent=15 // pred_check_branch
          %282 = sbr.rel (%p280) target = $region32
        $region31: #{tpu_custom_call.1} parent=15 // pred_region
          %s283 = sand.u32 %s110, 1
          %s284 = scalar_lea.sflag [#allocation9], %s283
          %s285 = sand.u32 %s110, 1
          %s286 = smul.addr %s285, 12
          %s287 = scalar_lea.vmem [#allocation8], %s286
          %s289 = ssub.s32 192, 192
          %290 = vsyncadd %s284, %s289
          %s291 = smul.addr %s22, 3
          %s292 = smul.addr %s291, 64
          %s293 = scalar_lea.hbm %s3, %s292
          %s295 = sshll.u32 %s287, 4
          %s296 = int_to_ptr.vmem [resolvable:$true] %s295
          %298 = dma.hbm_to_vmem [thread:$0]  %s293, 192, %s296, %s284
        $region32: #{tpu_custom_call.1} parent=15 // pred_fallthru
          _
      $region16: #{tpu_custom_call.1} parent=5 // pred_fallthru
        _
      %p299 = scmp.le.s32.totalorder 1, %s22
      %p300 = scmp.lt.s32.totalorder %s22, 3
      %p301 = pnand %p299, %p300
      %p302 = pneg %p301
      // Predicated region
      $region33: #{tpu_custom_call.1} parent=5 // pred_check
        _
      $region34: #{tpu_custom_call.1} parent=5 // pred_check_branch
        %304 = sbr.rel (%p301) target = $region36
      $region35: #{tpu_custom_call.1} parent=5 // pred_region
        %s305 = ssub.s32 %s22, 1
        %s306 = sand.u32 %s35, 1
        %s307 = scalar_lea.sflag [#allocation4], %s306
        %s308 = sand.u32 %s35, 1
        %s309 = smul.addr %s308, 24
        %s310 = scalar_lea.vmem [#allocation3], %s309
        // Predicated region
        $region37: #{tpu_custom_call.1} parent=35 // pred_check
          %p311 = pneg %p48
        $region38: #{tpu_custom_call.1} parent=35 // pred_check_branch
          %313 = sbr.rel (%p311) target = $region40
        $region39: #{tpu_custom_call.1} parent=35 // pred_region
          %314 = dma.done %s307, 384
        $region40: #{tpu_custom_call.1} parent=35 // pred_fallthru
          _
        %s315 = sand.u32 %s27, 1
        %s316 = scalar_lea.sflag [#allocation6], %s315
        %s317 = sand.u32 %s61, 1
        %s318 = smul.addr %s317, 12
        %s319 = scalar_lea.vmem [#allocation5], %s318
        // Predicated region
        $region41: #{tpu_custom_call.1} parent=35 // pred_check
          %p320 = pneg %p74
        $region42: #{tpu_custom_call.1} parent=35 // pred_check_branch
          %322 = sbr.rel (%p320) target = $region44
        $region43: #{tpu_custom_call.1} parent=35 // pred_region
          %323 = dma.done %s316, 192
        $region44: #{tpu_custom_call.1} parent=35 // pred_fallthru
          _
        %s324 = sand.u32 %s27, 1
        %s325 = scalar_lea.sflag [#allocation6], %s324
        %s326 = sand.u32 %s87, 1
        %s327 = smul.addr %s326, 3
        %s328 = scalar_lea.vmem [#allocation7], %s327
        // Predicated region
        $region45: #{tpu_custom_call.1} parent=35 // pred_check
          %p329 = pneg %p100
        $region46: #{tpu_custom_call.1} parent=35 // pred_check_branch
          %331 = sbr.rel (%p329) target = $region48
        $region47: #{tpu_custom_call.1} parent=35 // pred_region
          %332 = dma.done %s325, 48
        $region48: #{tpu_custom_call.1} parent=35 // pred_fallthru
          _
        %s333 = sand.u32 %s113, 1
        %s334 = scalar_lea.sflag [#allocation9], %s333
        %s335 = sand.u32 %s113, 1
        %s336 = smul.addr %s335, 12
        %s337 = scalar_lea.vmem [#allocation8], %s336
        // Predicated region
        $region49: #{tpu_custom_call.1} parent=35 // pred_check
          %p338 = pneg %p126
        $region50: #{tpu_custom_call.1} parent=35 // pred_check_branch
          %340 = sbr.rel (%p338) target = $region52
        $region51: #{tpu_custom_call.1} parent=35 // pred_region
          %341 = dma.done %s334, 192
        $region52: #{tpu_custom_call.1} parent=35 // pred_fallthru
          _
        %s342 = sand.u32 %s35, 1
        %s343 = scalar_lea.sflag [#allocation4], %s342
        %s344 = sand.u32 %s35, 1
        %s345 = smul.addr %s344, 24
        %s346 = scalar_lea.vmem [#allocation3], %s345
        %p347 = pneg %p48
        %p348 = pneg %p45
        %s349 = sand.u32 %s27, 1
        %s350 = scalar_lea.sflag [#allocation6], %s349
        %s351 = sand.u32 %s61, 1
        %s352 = smul.addr %s351, 12
        %s353 = scalar_lea.vmem [#allocation5], %s352
        %p354 = pneg %p74
        %p355 = pneg %p71
        %s356 = sand.u32 %s27, 1
        %s357 = scalar_lea.sflag [#allocation6], %s356
        %s358 = sand.u32 %s87, 1
        %s359 = smul.addr %s358, 3
        %s360 = scalar_lea.vmem [#allocation7], %s359
        %p361 = pneg %p100
        %p362 = pneg %p97
        %s363 = sand.u32 %s113, 1
        %s364 = scalar_lea.sflag [#allocation9], %s363
        %s365 = sand.u32 %s113, 1
        %s366 = smul.addr %s365, 12
        %s367 = scalar_lea.vmem [#allocation8], %s366
        %p368 = pneg %p126
        %p369 = pneg %p123
        %p370 = pneg %p152
        %p371 = pneg %p149
        %p372 = scmp.lt.s32.totalorder %s27, 1
        %s373 = scalar_select %p372, %s27, 1
        %s374 = scalar_lea.vmem %s4, %s373
        %p375 = pneg %p178
        %p376 = pneg %p175
        %p377 = scmp.lt.s32.totalorder %s27, 1
        %s378 = scalar_select %p377, %s27, 1
        %s379 = scalar_lea.vmem %s5, %s378
        %p380 = pneg %p204
        %p381 = pneg %p201
        %p382 = scmp.lt.s32.totalorder %s27, 1
        %s383 = scalar_select %p382, %s27, 1
        %s384 = scalar_lea.vmem %s6, %s383
        %p385 = scmp.lt.s32.totalorder %s27, 1
        %s386 = scalar_select %p385, %s27, 1
        %s387 = scalar_lea.vmem %s4, %s386
        %p388 = scmp.lt.s32.totalorder %s27, 1
        %s389 = scalar_select %p388, %s27, 1
        %s390 = scalar_lea.vmem %s5, %s389
        %p391 = scmp.lt.s32.totalorder %s27, 1
        %s392 = scalar_select %p391, %s27, 1
        %s393 = scalar_lea.vmem %s6, %s392
        %v394 = vld [vmem:[%s310] sm:$0xff]
        %v395 = vld [vmem:[%s310 + $0x8] sm:$0xff]
        %v396 = vld [vmem:[%s310 + $0x10] sm:$0xff]
        %v397 = vld [vmem:[%s319] sm:$0xff]
        %v398 = vld [vmem:[%s319 + $0x8] sm:$0xf]
        %v399 = vld [vmem:[%s337] sm:$0xff]
        %v400 = vld [vmem:[%s337 + $0x8] sm:$0xf]
        %v401 = vld [vmem:[%s328] sm:$0x7]
        %v402 = vrot.slane %v394, 4
        %v403 = vmax.f32 %v394, %v402
        %v404 = vrot.slane %v403, 2
        %v405 = vmax.f32 %v403, %v404
        %v406 = vrot.slane %v405, 1
        %v407 = vmax.f32 %v405, %v406
        %v408 = vrot.slane %v395, 4
        %v409 = vmax.f32 %v395, %v408
        %v410 = vrot.slane %v409, 2
        %v411 = vmax.f32 %v409, %v410
        %v412 = vrot.slane %v411, 1
        %v413 = vmax.f32 %v411, %v412
        %v414 = vrot.slane %v396, 4
        %v415 = vmax.f32 %v396, %v414
        %v416 = vrot.slane %v415, 2
        %v417 = vmax.f32 %v415, %v416
        %v418 = vrot.slane %v417, 1
        %v419 = vmax.f32 %v417, %v418
        %v420 = vsub.f32 %v394, %v407
        %v421 = vsub.f32 %v395, %v413
        %v422 = vsub.f32 %v396, %v419
        %v423 = vmul.f32 %v420, 1.442695
        %v424 = vpow.pop %v423
        %v425 = vmul.f32 %v421, 1.442695
        %v426 = vpow.pop %v425
        %v427 = vmul.f32 %v422, 1.442695
        %v428 = vpow.pop %v427
        %v429 = vrot.slane %v424, 4
        %v430 = vadd.f32 %v424, %v429
        %v431 = vrot.slane %v430, 2
        %v432 = vadd.f32 %v430, %v431
        %v433 = vrot.slane %v432, 1
        %v434 = vadd.f32 %v432, %v433
        %v435 = vrot.slane %v426, 4
        %v436 = vadd.f32 %v426, %v435
        %v437 = vrot.slane %v436, 2
        %v438 = vadd.f32 %v436, %v437
        %v439 = vrot.slane %v438, 1
        %v440 = vadd.f32 %v438, %v439
        %v441 = vrot.slane %v428, 4
        %v442 = vadd.f32 %v428, %v441
        %v443 = vrot.slane %v442, 2
        %v444 = vadd.f32 %v442, %v443
        %v445 = vrot.slane %v444, 1
        %v446 = vadd.f32 %v444, %v445
        %v447 = vlog2.pop %v434
        %v448 = vmul.f32 %v447, 0.6931472
        %v449 = vlog2.pop %v440
        %v450 = vmul.f32 %v449, 0.6931472
        %v451 = vlog2.pop %v446
        %v452 = vmul.f32 %v451, 0.6931472
        %v453 = vadd.f32 %v448, %v407
        %v454 = vadd.f32 %v450, %v413
        %v455 = vadd.f32 %v452, %v419
        %v456 = vsub.f32 %v453, %v394
        %v457 = vsub.f32 %v454, %v395
        %v458 = vsub.f32 %v455, %v396
        %v459 = vlaneseq
        %v460 = vshrl.u32 %v459, 7
        %v461 = vlaneseq
        %v462 = vshrl.u32 %v461, 7
        %v463 = vsub.s32 0, %v462
        %v464 = vrot.slane %v401, %v463
        %v465 = vlaneseq
        %v466 = vshrl.u32 %v465, 7
        %v467 = vsub.s32 1, %v466
        %v468 = vrot.slane %v401, %v467
        %v469 = vlaneseq
        %v470 = vshrl.u32 %v469, 7
        %v471 = vsub.s32 2, %v470
        %v472 = vrot.slane %v401, %v471
        %vm473 = vcmp.eq.s32.totalorder %v460, %v464
        %vm474 = vcmp.eq.s32.totalorder %v460, %v468
        %vm475 = vcmp.eq.s32.totalorder %v460, %v472
        %v476 = vsel %vm473, %v394, 0.0
        %v477 = vsel %vm474, %v395, 0.0
        %v478 = vsel %vm475, %v396, 0.0
        %v479 = vrot.slane %v476, 4
        %v480 = vadd.f32 %v476, %v479
        %v481 = vrot.slane %v480, 2
        %v482 = vadd.f32 %v480, %v481
        %v483 = vrot.slane %v482, 1
        %v484 = vadd.f32 %v482, %v483
        %v485 = vrot.slane %v477, 4
        %v486 = vadd.f32 %v477, %v485
        %v487 = vrot.slane %v486, 2
        %v488 = vadd.f32 %v486, %v487
        %v489 = vrot.slane %v488, 1
        %v490 = vadd.f32 %v488, %v489
        %v491 = vrot.slane %v478, 4
        %v492 = vadd.f32 %v478, %v491
        %v493 = vrot.slane %v492, 2
        %v494 = vadd.f32 %v492, %v493
        %v495 = vrot.slane %v494, 1
        %v496 = vadd.f32 %v494, %v495
        %v497 = vsub.f32 %v453, %v484
        %v498 = vsub.f32 %v454, %v490
        %v499 = vsub.f32 %v455, %v496
        %vm500 = vcmp.gt.s32.totalorder %v401, 0
        %v501 = vsel %vm500, 1, 0
        %v502 = vlaneseq
        %v503 = vshrl.u32 %v502, 7
        %v504 = vsub.s32 0, %v503
        %v505 = vrot.slane %v501, %v504
        %v506 = vlaneseq
        %v507 = vshrl.u32 %v506, 7
        %v508 = vsub.s32 1, %v507
        %v509 = vrot.slane %v501, %v508
        %v510 = vlaneseq
        %v511 = vshrl.u32 %v510, 7
        %v512 = vsub.s32 2, %v511
        %v513 = vrot.slane %v501, %v512
        %vm514 = vcmask 1040384
        %v515 = vsel %vm514, %v505, 0
        %v516 = vsel %vm514, %v509, 0
        %v517 = vsel %vm514, %v513, 0
        %v518 = vadd.s32 %v515, %v516
        %v519 = vadd.s32 %v518, %v517
        %v520 = vand.u32 %v519, 65535
        %v521 = vshrl.u32 %v519, 16
        %v522 = vcvt.s32.f32 %v520
        %v523 = vcvt.s32.f32 %v521
        %524 = vadd.xlane.f32.xlu0 %v522
        %v525 = vpop.xlane.xlu0 %524
        %526 = vadd.xlane.f32.xlu0 %v523
        %v527 = vpop.xlane.xlu0 %526
        %v528 = vcvt.f32.s32 %v525
        %v529 = vcvt.f32.s32 %v527
        %v530 = vshll.u32 %v529, 16
        %v531 = vadd.s32 %v530, %v528
        %v532 = vrot.slane %v531, 4
        %v533 = vadd.s32 %v531, %v532
        %v534 = vrot.slane %v533, 2
        %v535 = vadd.s32 %v533, %v534
        %v536 = vrot.slane %v535, 1
        %v537 = vadd.s32 %v535, %v536
        %s538 = vtos %v537
        %v539 = vsub.f32 %v397, %v399
        %v540 = vsub.f32 %v398, %v400
        %v541 = vmul.f32 %v539, %v539
        %v542 = vmul.f32 %v540, %v540
        %v544 = vcombine.high %v541, %v541
        %vm546 = vcmask 1043456
        %v547 = vsel %vm546, %v541, 0.0
        %v548 = vrot.slane %v547, 4
        %v549 = vadd.f32 %v547, %v548
        %v550 = vrot.slane %v549, 2
        %v551 = vadd.f32 %v549, %v550
        %v552 = vrot.slane %v551, 1
        %v553 = vadd.f32 %v551, %v552
        %v554 = vsel %vm546, %v544, 0.0
        %v555 = vrot.slane %v554, 4
        %v556 = vadd.f32 %v554, %v555
        %v557 = vrot.slane %v556, 2
        %v558 = vadd.f32 %v556, %v557
        %v559 = vrot.slane %v558, 1
        %v560 = vadd.f32 %v558, %v559
        %v561 = vsel %vm546, %v542, 0.0
        %v562 = vrot.slane %v561, 4
        %v563 = vadd.f32 %v561, %v562
        %v564 = vrot.slane %v563, 2
        %v565 = vadd.f32 %v563, %v564
        %v566 = vrot.slane %v565, 1
        %v567 = vadd.f32 %v565, %v566
        %v571 = vcombine.low %v553, %v560
        %v573 = vunpack.c.l.s4 1966171168
        %v574 = vunpack.c.0.s8 %v573
        %v575 = vlaneseq
        %v576 = vshrl.u32 %v575, 7
        %v577 = vsub.s32 %v574, %v576
        %v578 = vrot.slane %v571, %v577
        %v580 = vunpack.c.l.s4 1966171168
        %v581 = vunpack.c.0.s8 %v580
        %v582 = vlaneseq
        %v583 = vshrl.u32 %v582, 7
        %v584 = vsub.s32 %v581, %v583
        %v585 = vrot.slane %v567, %v584
        %v586 = vcombine.low %v578, %v585
        %v588 = vunpack.c.l.s4 1966171168
        %v589 = vunpack.c.0.s8 %v588
        %v590 = vlaneseq
        %v591 = vshrl.u32 %v590, 7
        %v592 = vsub.s32 %v589, %v591
        %v593 = vrot.slane %v586, %v592
        %v595 = vsel %vm500, %v593, 0.0
        %v597 = vlaneseq
        %v598 = vshrl.u32 %v597, 7
        %v599 = vsub.s32 0, %v598
        %v600 = vrot.slane %v595, %v599
        %v601 = vlaneseq
        %v602 = vshrl.u32 %v601, 7
        %v603 = vsub.s32 1, %v602
        %v604 = vrot.slane %v595, %v603
        %v605 = vlaneseq
        %v606 = vshrl.u32 %v605, 7
        %v607 = vsub.s32 2, %v606
        %v608 = vrot.slane %v595, %v607
        %v612 = vsel %vm514, %v600, 0.0
        %v613 = vsel %vm514, %v604, 0.0
        %v614 = vadd.f32 %v612, %v613
        %v615 = vsel %vm514, %v608, 0.0
        %v616 = vadd.f32 %v614, %v615
        %617 = vadd.xlane.f32.xlu0 %v616
        %v618 = vpop.xlane.xlu0 %617
        %v619 = vrot.slane %v618, 4
        %v620 = vadd.f32 %v618, %v619
        %v621 = vrot.slane %v620, 2
        %v622 = vadd.f32 %v620, %v621
        %v623 = vrot.slane %v622, 1
        %v624 = vadd.f32 %v622, %v623
        %s625 = vtos %v624
        %v629 = vcombine.low %v456, %v457
        %v631 = vunpack.c.l.s4 1966171168
        %v632 = vunpack.c.0.s8 %v631
        %v633 = vlaneseq
        %v634 = vshrl.u32 %v633, 7
        %v635 = vsub.s32 %v632, %v634
        %v636 = vrot.slane %v629, %v635
        %v638 = vunpack.c.l.s4 1966171168
        %v639 = vunpack.c.0.s8 %v638
        %v640 = vlaneseq
        %v641 = vshrl.u32 %v640, 7
        %v642 = vsub.s32 %v639, %v641
        %v643 = vrot.slane %v458, %v642
        %v644 = vcombine.low %v636, %v643
        %v646 = vunpack.c.l.s4 1966171168
        %v647 = vunpack.c.0.s8 %v646
        %v648 = vlaneseq
        %v649 = vshrl.u32 %v648, 7
        %v650 = vsub.s32 %v647, %v649
        %v651 = vrot.slane %v644, %v650
        %v653 = vsel %vm500, -1e+30, %v651
        %v655 = vlaneseq
        %v656 = vshrl.u32 %v655, 7
        %v657 = vsub.s32 0, %v656
        %v658 = vrot.slane %v653, %v657
        %v659 = vlaneseq
        %v660 = vshrl.u32 %v659, 7
        %v661 = vsub.s32 1, %v660
        %v662 = vrot.slane %v653, %v661
        %v663 = vlaneseq
        %v664 = vshrl.u32 %v663, 7
        %v665 = vsub.s32 2, %v664
        %v666 = vrot.slane %v653, %v665
        %v670 = vlaneseq
        %v671 = vshrl.u32 %v670, 7
        %v672 = vsub.s32 0, %v671
        %v673 = vrot.slane %v658, %v672
        %675 = vbcast.lane.b32.xlu0 %v673, 256
        %v676 = vpop.permute.xlu0 %675
        %s678 = sor.u32 256, 8
        %679 = vbcast.lane.b32.xlu0 %v673, %s678
        %v680 = vpop.permute.xlu0 %679
        %s682 = sor.u32 256, 16
        %683 = vbcast.lane.b32.xlu0 %v673, %s682
        %v684 = vpop.permute.xlu0 %683
        %s686 = sor.u32 256, 24
        %687 = vbcast.lane.b32.xlu0 %v673, %s686
        %v688 = vpop.permute.xlu0 %687
        %s690 = sor.u32 256, 32
        %691 = vbcast.lane.b32.xlu0 %v673, %s690
        %v692 = vpop.permute.xlu0 %691
        %s694 = sor.u32 256, 40
        %695 = vbcast.lane.b32.xlu0 %v673, %s694
        %v696 = vpop.permute.xlu0 %695
        %s698 = sor.u32 256, 48
        %699 = vbcast.lane.b32.xlu0 %v673, %s698
        %v700 = vpop.permute.xlu0 %699
        %s702 = sor.u32 256, 56
        %703 = vbcast.lane.b32.xlu0 %v673, %s702
        %v704 = vpop.permute.xlu0 %703
        %s706 = sor.u32 256, 64
        %707 = vbcast.lane.b32.xlu0 %v673, %s706
        %v708 = vpop.permute.xlu0 %707
        %s710 = sor.u32 256, 72
        %711 = vbcast.lane.b32.xlu0 %v673, %s710
        %v712 = vpop.permute.xlu0 %711
        %s714 = sor.u32 256, 80
        %715 = vbcast.lane.b32.xlu0 %v673, %s714
        %v716 = vpop.permute.xlu0 %715
        %s718 = sor.u32 256, 88
        %719 = vbcast.lane.b32.xlu0 %v673, %s718
        %v720 = vpop.permute.xlu0 %719
        %s722 = sor.u32 256, 96
        %723 = vbcast.lane.b32.xlu0 %v673, %s722
        %v724 = vpop.permute.xlu0 %723
        %s726 = sor.u32 256, 104
        %727 = vbcast.lane.b32.xlu0 %v673, %s726
        %v728 = vpop.permute.xlu0 %727
        %s730 = sor.u32 256, 112
        %731 = vbcast.lane.b32.xlu0 %v673, %s730
        %v732 = vpop.permute.xlu0 %731
        %s734 = sor.u32 256, 120
        %735 = vbcast.lane.b32.xlu0 %v673, %s734
        %v736 = vpop.permute.xlu0 %735
        %v737 = vlaneseq
        %v738 = vshrl.u32 %v737, 7
        %v739 = vsub.s32 0, %v738
        %v740 = vrot.slane %v662, %v739
        %742 = vbcast.lane.b32.xlu0 %v740, 256
        %v743 = vpop.permute.xlu0 %742
        %s745 = sor.u32 256, 8
        %746 = vbcast.lane.b32.xlu0 %v740, %s745
        %v747 = vpop.permute.xlu0 %746
        %s749 = sor.u32 256, 16
        %750 = vbcast.lane.b32.xlu0 %v740, %s749
        %v751 = vpop.permute.xlu0 %750
        %s753 = sor.u32 256, 24
        %754 = vbcast.lane.b32.xlu0 %v740, %s753
        %v755 = vpop.permute.xlu0 %754
        %s757 = sor.u32 256, 32
        %758 = vbcast.lane.b32.xlu0 %v740, %s757
        %v759 = vpop.permute.xlu0 %758
        %s761 = sor.u32 256, 40
        %762 = vbcast.lane.b32.xlu0 %v740, %s761
        %v763 = vpop.permute.xlu0 %762
        %s765 = sor.u32 256, 48
        %766 = vbcast.lane.b32.xlu0 %v740, %s765
        %v767 = vpop.permute.xlu0 %766
        %s769 = sor.u32 256, 56
        %770 = vbcast.lane.b32.xlu0 %v740, %s769
        %v771 = vpop.permute.xlu0 %770
        %s773 = sor.u32 256, 64
        %774 = vbcast.lane.b32.xlu0 %v740, %s773
        %v775 = vpop.permute.xlu0 %774
        %s777 = sor.u32 256, 72
        %778 = vbcast.lane.b32.xlu0 %v740, %s777
        %v779 = vpop.permute.xlu0 %778
        %s781 = sor.u32 256, 80
        %782 = vbcast.lane.b32.xlu0 %v740, %s781
        %v783 = vpop.permute.xlu0 %782
        %s785 = sor.u32 256, 88
        %786 = vbcast.lane.b32.xlu0 %v740, %s785
        %v787 = vpop.permute.xlu0 %786
        %s789 = sor.u32 256, 96
        %790 = vbcast.lane.b32.xlu0 %v740, %s789
        %v791 = vpop.permute.xlu0 %790
        %s793 = sor.u32 256, 104
        %794 = vbcast.lane.b32.xlu0 %v740, %s793
        %v795 = vpop.permute.xlu0 %794
        %s797 = sor.u32 256, 112
        %798 = vbcast.lane.b32.xlu0 %v740, %s797
        %v799 = vpop.permute.xlu0 %798
        %s801 = sor.u32 256, 120
        %802 = vbcast.lane.b32.xlu0 %v740, %s801
        %v803 = vpop.permute.xlu0 %802
        %v804 = vlaneseq
        %v805 = vshrl.u32 %v804, 7
        %v806 = vsub.s32 0, %v805
        %v807 = vrot.slane %v666, %v806
        %809 = vbcast.lane.b32.xlu0 %v807, 256
        %v810 = vpop.permute.xlu0 %809
        %s812 = sor.u32 256, 8
        %813 = vbcast.lane.b32.xlu0 %v807, %s812
        %v814 = vpop.permute.xlu0 %813
        %s816 = sor.u32 256, 16
        %817 = vbcast.lane.b32.xlu0 %v807, %s816
        %v818 = vpop.permute.xlu0 %817
        %s820 = sor.u32 256, 24
        %821 = vbcast.lane.b32.xlu0 %v807, %s820
        %v822 = vpop.permute.xlu0 %821
        %s824 = sor.u32 256, 32
        %825 = vbcast.lane.b32.xlu0 %v807, %s824
        %v826 = vpop.permute.xlu0 %825
        %s828 = sor.u32 256, 40
        %829 = vbcast.lane.b32.xlu0 %v807, %s828
        %v830 = vpop.permute.xlu0 %829
        %s832 = sor.u32 256, 48
        %833 = vbcast.lane.b32.xlu0 %v807, %s832
        %v834 = vpop.permute.xlu0 %833
        %s836 = sor.u32 256, 56
        %837 = vbcast.lane.b32.xlu0 %v807, %s836
        %v838 = vpop.permute.xlu0 %837
        %s840 = sor.u32 256, 64
        %841 = vbcast.lane.b32.xlu0 %v807, %s840
        %v842 = vpop.permute.xlu0 %841
        %s844 = sor.u32 256, 72
        %845 = vbcast.lane.b32.xlu0 %v807, %s844
        %v846 = vpop.permute.xlu0 %845
        %s848 = sor.u32 256, 80
        %849 = vbcast.lane.b32.xlu0 %v807, %s848
        %v850 = vpop.permute.xlu0 %849
        %s852 = sor.u32 256, 88
        %853 = vbcast.lane.b32.xlu0 %v807, %s852
        %v854 = vpop.permute.xlu0 %853
        %s856 = sor.u32 256, 96
        %857 = vbcast.lane.b32.xlu0 %v807, %s856
        %v858 = vpop.permute.xlu0 %857
        %s860 = sor.u32 256, 104
        %861 = vbcast.lane.b32.xlu0 %v807, %s860
        %v862 = vpop.permute.xlu0 %861
        %s864 = sor.u32 256, 112
        %865 = vbcast.lane.b32.xlu0 %v807, %s864
        %v866 = vpop.permute.xlu0 %865
        %s868 = sor.u32 256, 120
        %869 = vbcast.lane.b32.xlu0 %v807, %s868
        %v870 = vpop.permute.xlu0 %869
        %vm871 = vcmask 7168
        %872 = vst.msk [vmem:[#allocation2] sm:$0xff] %vm871, %v676
        %873 = vst.msk [vmem:[#allocation2 + $0x8] sm:$0xff] %vm871, %v680
        %874 = vst.msk [vmem:[#allocation2 + $0x10] sm:$0xff] %vm871, %v684
        %875 = vst.msk [vmem:[#allocation2 + $0x18] sm:$0xff] %vm871, %v688
        %876 = vst.msk [vmem:[#allocation2 + $0x20] sm:$0xff] %vm871, %v692
        %877 = vst.msk [vmem:[#allocation2 + $0x28] sm:$0xff] %vm871, %v696
        %878 = vst.msk [vmem:[#allocation2 + $0x30] sm:$0xff] %vm871, %v700
        %879 = vst.msk [vmem:[#allocation2 + $0x38] sm:$0xff] %vm871, %v704
        %880 = vst.msk [vmem:[#allocation2 + $0x40] sm:$0xff] %vm871, %v708
        %881 = vst.msk [vmem:[#allocation2 + $0x48] sm:$0xff] %vm871, %v712
        %882 = vst.msk [vmem:[#allocation2 + $0x50] sm:$0xff] %vm871, %v716
        %883 = vst.msk [vmem:[#allocation2 + $0x58] sm:$0xff] %vm871, %v720
        %884 = vst.msk [vmem:[#allocation2 + $0x60] sm:$0xff] %vm871, %v724
        %885 = vst.msk [vmem:[#allocation2 + $0x68] sm:$0xff] %vm871, %v728
        %886 = vst.msk [vmem:[#allocation2 + $0x70] sm:$0xff] %vm871, %v732
        %887 = vst.msk [vmem:[#allocation2 + $0x78] sm:$0xff] %vm871, %v736
        %888 = vst.msk [vmem:[#allocation2 + $0x80] sm:$0xff] %vm871, %v743
        %889 = vst.msk [vmem:[#allocation2 + $0x88] sm:$0xff] %vm871, %v747
        %890 = vst.msk [vmem:[#allocation2 + $0x90] sm:$0xff] %vm871, %v751
        %891 = vst.msk [vmem:[#allocation2 + $0x98] sm:$0xff] %vm871, %v755
        %892 = vst.msk [vmem:[#allocation2 + $0xa0] sm:$0xff] %vm871, %v759
        %893 = vst.msk [vmem:[#allocation2 + $0xa8] sm:$0xff] %vm871, %v763
        %894 = vst.msk [vmem:[#allocation2 + $0xb0] sm:$0xff] %vm871, %v767
        %895 = vst.msk [vmem:[#allocation2 + $0xb8] sm:$0xff] %vm871, %v771
        %896 = vst.msk [vmem:[#allocation2 + $0xc0] sm:$0xff] %vm871, %v775
        %897 = vst.msk [vmem:[#allocation2 + $0xc8] sm:$0xff] %vm871, %v779
        %898 = vst.msk [vmem:[#allocation2 + $0xd0] sm:$0xff] %vm871, %v783
        %899 = vst.msk [vmem:[#allocation2 + $0xd8] sm:$0xff] %vm871, %v787
        %900 = vst.msk [vmem:[#allocation2 + $0xe0] sm:$0xff] %vm871, %v791
        %901 = vst.msk [vmem:[#allocation2 + $0xe8] sm:$0xff] %vm871, %v795
        %902 = vst.msk [vmem:[#allocation2 + $0xf0] sm:$0xff] %vm871, %v799
        %903 = vst.msk [vmem:[#allocation2 + $0xf8] sm:$0xff] %vm871, %v803
        %904 = vst.msk [vmem:[#allocation2 + $0x100] sm:$0xff] %vm871, %v810
        %905 = vst.msk [vmem:[#allocation2 + $0x108] sm:$0xff] %vm871, %v814
        %906 = vst.msk [vmem:[#allocation2 + $0x110] sm:$0xff] %vm871, %v818
        %907 = vst.msk [vmem:[#allocation2 + $0x118] sm:$0xff] %vm871, %v822
        %908 = vst.msk [vmem:[#allocation2 + $0x120] sm:$0xff] %vm871, %v826
        %909 = vst.msk [vmem:[#allocation2 + $0x128] sm:$0xff] %vm871, %v830
        %910 = vst.msk [vmem:[#allocation2 + $0x130] sm:$0xff] %vm871, %v834
        %911 = vst.msk [vmem:[#allocation2 + $0x138] sm:$0xff] %vm871, %v838
        %912 = vst.msk [vmem:[#allocation2 + $0x140] sm:$0xff] %vm871, %v842
        %913 = vst.msk [vmem:[#allocation2 + $0x148] sm:$0xff] %vm871, %v846
        %914 = vst.msk [vmem:[#allocation2 + $0x150] sm:$0xff] %vm871, %v850
        %915 = vst.msk [vmem:[#allocation2 + $0x158] sm:$0xff] %vm871, %v854
        %916 = vst.msk [vmem:[#allocation2 + $0x160] sm:$0xff] %vm871, %v858
        %917 = vst.msk [vmem:[#allocation2 + $0x168] sm:$0xff] %vm871, %v862
        %918 = vst.msk [vmem:[#allocation2 + $0x170] sm:$0xff] %vm871, %v866
        %919 = vst.msk [vmem:[#allocation2 + $0x178] sm:$0xff] %vm871, %v870
        %v920 = vlaneseq
        %v921 = vand.u32 %v920, 127
        %v922 = vadd.s32 %v921, 128
        %v923 = vadd.s32 %v921, 256
        %v924 = vadd.s32 %v460, 8
        %v925 = vadd.s32 %v460, 16
        %v926 = vadd.s32 %v460, 24
        %v927 = vadd.s32 %v460, 32
        %v928 = vadd.s32 %v460, 40
        %v929 = vadd.s32 %v460, 48
        %v930 = vadd.s32 %v460, 56
        %v931 = vadd.s32 %v460, 64
        %v932 = vadd.s32 %v460, 72
        %v933 = vadd.s32 %v460, 80
        %v934 = vadd.s32 %v460, 88
        %v935 = vadd.s32 %v460, 96
        %v936 = vadd.s32 %v460, 104
        %v937 = vadd.s32 %v460, 112
        %v938 = vadd.s32 %v460, 120
        loop: start=0, step=1, limit=3
        $region53: #{tpu_custom_call.1} parent=35 // loop_pre_header
          _
        $region54: #{tpu_custom_call.1} parent=35 // loop_header
          %s940 = sphi 0, %s944
          %p941 = scmp.ge.s32.totalorder %s940, 3
          %v945 = vphi 0, %v1414
          %v946 = vphi 0, %v1415
          %v947 = vphi 0, %v1416
        $region55: #{tpu_custom_call.1} parent=35 // loop_header_branch
          %943 = sbr.rel (%p941) target = $region59
        $region56: #{tpu_custom_call.1} parent=35 // loop_body
          %s948 = smul.u32 %s940, 128
          %s949 = scalar_lea.vmem [#allocation2], %s948
          %v950 = vld [vmem:[%s949] sm:$0xff]
          %v951 = vld [vmem:[%s949 + $0x8] sm:$0xff]
          %v952 = vld [vmem:[%s949 + $0x10] sm:$0xff]
          %v953 = vld [vmem:[%s949 + $0x18] sm:$0xff]
          %v954 = vld [vmem:[%s949 + $0x20] sm:$0xff]
          %v955 = vld [vmem:[%s949 + $0x28] sm:$0xff]
          %v956 = vld [vmem:[%s949 + $0x30] sm:$0xff]
          %v957 = vld [vmem:[%s949 + $0x38] sm:$0xff]
          %v958 = vld [vmem:[%s949 + $0x40] sm:$0xff]
          %v959 = vld [vmem:[%s949 + $0x48] sm:$0xff]
          %v960 = vld [vmem:[%s949 + $0x50] sm:$0xff]
          %v961 = vld [vmem:[%s949 + $0x58] sm:$0xff]
          %v962 = vld [vmem:[%s949 + $0x60] sm:$0xff]
          %v963 = vld [vmem:[%s949 + $0x68] sm:$0xff]
          %v964 = vld [vmem:[%s949 + $0x70] sm:$0xff]
          %v965 = vld [vmem:[%s949 + $0x78] sm:$0xff]
          %967 = vset.pattern.permute.xlu0 0
          %968 = vperm.xlu0 %967, %v950
          %v969 = vpop.permute.xlu0 %968
          %972 = vset.pattern.permute.xlu0 0
          %973 = vperm.xlu0 %972, %v951
          %v974 = vpop.permute.xlu0 %973
          %977 = vset.pattern.permute.xlu0 0
          %978 = vperm.xlu0 %977, %v952
          %v979 = vpop.permute.xlu0 %978
          %982 = vset.pattern.permute.xlu0 0
          %983 = vperm.xlu0 %982, %v953
          %v984 = vpop.permute.xlu0 %983
          %987 = vset.pattern.permute.xlu0 0
          %988 = vperm.xlu0 %987, %v954
          %v989 = vpop.permute.xlu0 %988
          %992 = vset.pattern.permute.xlu0 0
          %993 = vperm.xlu0 %992, %v955
          %v994 = vpop.permute.xlu0 %993
          %997 = vset.pattern.permute.xlu0 0
          %998 = vperm.xlu0 %997, %v956
          %v999 = vpop.permute.xlu0 %998
          %1002 = vset.pattern.permute.xlu0 0
          %1003 = vperm.xlu0 %1002, %v957
          %v1004 = vpop.permute.xlu0 %1003
          %1007 = vset.pattern.permute.xlu0 0
          %1008 = vperm.xlu0 %1007, %v958
          %v1009 = vpop.permute.xlu0 %1008
          %1012 = vset.pattern.permute.xlu0 0
          %1013 = vperm.xlu0 %1012, %v959
          %v1014 = vpop.permute.xlu0 %1013
          %1017 = vset.pattern.permute.xlu0 0
          %1018 = vperm.xlu0 %1017, %v960
          %v1019 = vpop.permute.xlu0 %1018
          %1022 = vset.pattern.permute.xlu0 0
          %1023 = vperm.xlu0 %1022, %v961
          %v1024 = vpop.permute.xlu0 %1023
          %1027 = vset.pattern.permute.xlu0 0
          %1028 = vperm.xlu0 %1027, %v962
          %v1029 = vpop.permute.xlu0 %1028
          %1032 = vset.pattern.permute.xlu0 0
          %1033 = vperm.xlu0 %1032, %v963
          %v1034 = vpop.permute.xlu0 %1033
          %1037 = vset.pattern.permute.xlu0 0
          %1038 = vperm.xlu0 %1037, %v964
          %v1039 = vpop.permute.xlu0 %1038
          %1042 = vset.pattern.permute.xlu0 0
          %1043 = vperm.xlu0 %1042, %v965
          %v1044 = vpop.permute.xlu0 %1043
          %vm1046 = vcmp.gt.f32.partialorder %v969, %v658
          %vm1047 = vcmp.gt.f32.partialorder %v969, %v662
          %vm1048 = vcmp.gt.f32.partialorder %v969, %v666
          %vm1049 = vcmp.gt.f32.partialorder %v974, %v658
          %vm1050 = vcmp.gt.f32.partialorder %v974, %v662
          %vm1051 = vcmp.gt.f32.partialorder %v974, %v666
          %vm1052 = vcmp.gt.f32.partialorder %v979, %v658
          %vm1053 = vcmp.gt.f32.partialorder %v979, %v662
          %vm1054 = vcmp.gt.f32.partialorder %v979, %v666
          %vm1055 = vcmp.gt.f32.partialorder %v984, %v658
          %vm1056 = vcmp.gt.f32.partialorder %v984, %v662
          %vm1057 = vcmp.gt.f32.partialorder %v984, %v666
          %vm1058 = vcmp.gt.f32.partialorder %v989, %v658
          %vm1059 = vcmp.gt.f32.partialorder %v989, %v662
          %vm1060 = vcmp.gt.f32.partialorder %v989, %v666
          %vm1061 = vcmp.gt.f32.partialorder %v994, %v658
          %vm1062 = vcmp.gt.f32.partialorder %v994, %v662
          %vm1063 = vcmp.gt.f32.partialorder %v994, %v666
          %vm1064 = vcmp.gt.f32.partialorder %v999, %v658
          %vm1065 = vcmp.gt.f32.partialorder %v999, %v662
          %vm1066 = vcmp.gt.f32.partialorder %v999, %v666
          %vm1067 = vcmp.gt.f32.partialorder %v1004, %v658
          %vm1068 = vcmp.gt.f32.partialorder %v1004, %v662
          %vm1069 = vcmp.gt.f32.partialorder %v1004, %v666
          %vm1070 = vcmp.gt.f32.partialorder %v1009, %v658
          %vm1071 = vcmp.gt.f32.partialorder %v1009, %v662
          %vm1072 = vcmp.gt.f32.partialorder %v1009, %v666
          %vm1073 = vcmp.gt.f32.partialorder %v1014, %v658
          %vm1074 = vcmp.gt.f32.partialorder %v1014, %v662
          %vm1075 = vcmp.gt.f32.partialorder %v1014, %v666
          %vm1076 = vcmp.gt.f32.partialorder %v1019, %v658
          %vm1077 = vcmp.gt.f32.partialorder %v1019, %v662
          %vm1078 = vcmp.gt.f32.partialorder %v1019, %v666
          %vm1079 = vcmp.gt.f32.partialorder %v1024, %v658
          %vm1080 = vcmp.gt.f32.partialorder %v1024, %v662
          %vm1081 = vcmp.gt.f32.partialorder %v1024, %v666
          %vm1082 = vcmp.gt.f32.partialorder %v1029, %v658
          %vm1083 = vcmp.gt.f32.partialorder %v1029, %v662
          %vm1084 = vcmp.gt.f32.partialorder %v1029, %v666
          %vm1085 = vcmp.gt.f32.partialorder %v1034, %v658
          %vm1086 = vcmp.gt.f32.partialorder %v1034, %v662
          %vm1087 = vcmp.gt.f32.partialorder %v1034, %v666
          %vm1088 = vcmp.gt.f32.partialorder %v1039, %v658
          %vm1089 = vcmp.gt.f32.partialorder %v1039, %v662
          %vm1090 = vcmp.gt.f32.partialorder %v1039, %v666
          %vm1091 = vcmp.gt.f32.partialorder %v1044, %v658
          %vm1092 = vcmp.gt.f32.partialorder %v1044, %v662
          %vm1093 = vcmp.gt.f32.partialorder %v1044, %v666
          %vm1094 = vcmp.eq.f32.partialorder %v969, %v658
          %vm1095 = vcmp.eq.f32.partialorder %v969, %v662
          %vm1096 = vcmp.eq.f32.partialorder %v969, %v666
          %vm1097 = vcmp.eq.f32.partialorder %v974, %v658
          %vm1098 = vcmp.eq.f32.partialorder %v974, %v662
          %vm1099 = vcmp.eq.f32.partialorder %v974, %v666
          %vm1100 = vcmp.eq.f32.partialorder %v979, %v658
          %vm1101 = vcmp.eq.f32.partialorder %v979, %v662
          %vm1102 = vcmp.eq.f32.partialorder %v979, %v666
          %vm1103 = vcmp.eq.f32.partialorder %v984, %v658
          %vm1104 = vcmp.eq.f32.partialorder %v984, %v662
          %vm1105 = vcmp.eq.f32.partialorder %v984, %v666
          %vm1106 = vcmp.eq.f32.partialorder %v989, %v658
          %vm1107 = vcmp.eq.f32.partialorder %v989, %v662
          %vm1108 = vcmp.eq.f32.partialorder %v989, %v666
          %vm1109 = vcmp.eq.f32.partialorder %v994, %v658
          %vm1110 = vcmp.eq.f32.partialorder %v994, %v662
          %vm1111 = vcmp.eq.f32.partialorder %v994, %v666
          %vm1112 = vcmp.eq.f32.partialorder %v999, %v658
          %vm1113 = vcmp.eq.f32.partialorder %v999, %v662
          %vm1114 = vcmp.eq.f32.partialorder %v999, %v666
          %vm1115 = vcmp.eq.f32.partialorder %v1004, %v658
          %vm1116 = vcmp.eq.f32.partialorder %v1004, %v662
          %vm1117 = vcmp.eq.f32.partialorder %v1004, %v666
          %vm1118 = vcmp.eq.f32.partialorder %v1009, %v658
          %vm1119 = vcmp.eq.f32.partialorder %v1009, %v662
          %vm1120 = vcmp.eq.f32.partialorder %v1009, %v666
          %vm1121 = vcmp.eq.f32.partialorder %v1014, %v658
          %vm1122 = vcmp.eq.f32.partialorder %v1014, %v662
          %vm1123 = vcmp.eq.f32.partialorder %v1014, %v666
          %vm1124 = vcmp.eq.f32.partialorder %v1019, %v658
          %vm1125 = vcmp.eq.f32.partialorder %v1019, %v662
          %vm1126 = vcmp.eq.f32.partialorder %v1019, %v666
          %vm1127 = vcmp.eq.f32.partialorder %v1024, %v658
          %vm1128 = vcmp.eq.f32.partialorder %v1024, %v662
          %vm1129 = vcmp.eq.f32.partialorder %v1024, %v666
          %vm1130 = vcmp.eq.f32.partialorder %v1029, %v658
          %vm1131 = vcmp.eq.f32.partialorder %v1029, %v662
          %vm1132 = vcmp.eq.f32.partialorder %v1029, %v666
          %vm1133 = vcmp.eq.f32.partialorder %v1034, %v658
          %vm1134 = vcmp.eq.f32.partialorder %v1034, %v662
          %vm1135 = vcmp.eq.f32.partialorder %v1034, %v666
          %vm1136 = vcmp.eq.f32.partialorder %v1039, %v658
          %vm1137 = vcmp.eq.f32.partialorder %v1039, %v662
          %vm1138 = vcmp.eq.f32.partialorder %v1039, %v666
          %vm1139 = vcmp.eq.f32.partialorder %v1044, %v658
          %vm1140 = vcmp.eq.f32.partialorder %v1044, %v662
          %vm1141 = vcmp.eq.f32.partialorder %v1044, %v666
          %v1142 = vstv %s948
          %v1143 = vadd.s32 %v460, %v1142
          %v1144 = vadd.s32 %v924, %v1142
          %v1145 = vadd.s32 %v925, %v1142
          %v1146 = vadd.s32 %v926, %v1142
          %v1147 = vadd.s32 %v927, %v1142
          %v1148 = vadd.s32 %v928, %v1142
          %v1149 = vadd.s32 %v929, %v1142
          %v1150 = vadd.s32 %v930, %v1142
          %v1151 = vadd.s32 %v931, %v1142
          %v1152 = vadd.s32 %v932, %v1142
          %v1153 = vadd.s32 %v933, %v1142
          %v1154 = vadd.s32 %v934, %v1142
          %v1155 = vadd.s32 %v935, %v1142
          %v1156 = vadd.s32 %v936, %v1142
          %v1157 = vadd.s32 %v937, %v1142
          %v1158 = vadd.s32 %v938, %v1142
          %vm1159 = vcmp.lt.s32.totalorder %v1143, %v921
          %vm1160 = vcmp.lt.s32.totalorder %v1143, %v922
          %vm1161 = vcmp.lt.s32.totalorder %v1143, %v923
          %vm1162 = vcmp.lt.s32.totalorder %v1144, %v921
          %vm1163 = vcmp.lt.s32.totalorder %v1144, %v922
          %vm1164 = vcmp.lt.s32.totalorder %v1144, %v923
          %vm1165 = vcmp.lt.s32.totalorder %v1145, %v921
          %vm1166 = vcmp.lt.s32.totalorder %v1145, %v922
          %vm1167 = vcmp.lt.s32.totalorder %v1145, %v923
          %vm1168 = vcmp.lt.s32.totalorder %v1146, %v921
          %vm1169 = vcmp.lt.s32.totalorder %v1146, %v922
          %vm1170 = vcmp.lt.s32.totalorder %v1146, %v923
          %vm1171 = vcmp.lt.s32.totalorder %v1147, %v921
          %vm1172 = vcmp.lt.s32.totalorder %v1147, %v922
          %vm1173 = vcmp.lt.s32.totalorder %v1147, %v923
          %vm1174 = vcmp.lt.s32.totalorder %v1148, %v921
          %vm1175 = vcmp.lt.s32.totalorder %v1148, %v922
          %vm1176 = vcmp.lt.s32.totalorder %v1148, %v923
          %vm1177 = vcmp.lt.s32.totalorder %v1149, %v921
          %vm1178 = vcmp.lt.s32.totalorder %v1149, %v922
          %vm1179 = vcmp.lt.s32.totalorder %v1149, %v923
          %vm1180 = vcmp.lt.s32.totalorder %v1150, %v921
          %vm1181 = vcmp.lt.s32.totalorder %v1150, %v922
          %vm1182 = vcmp.lt.s32.totalorder %v1150, %v923
          %vm1183 = vcmp.lt.s32.totalorder %v1151, %v921
          %vm1184 = vcmp.lt.s32.totalorder %v1151, %v922
          %vm1185 = vcmp.lt.s32.totalorder %v1151, %v923
          %vm1186 = vcmp.lt.s32.totalorder %v1152, %v921
          %vm1187 = vcmp.lt.s32.totalorder %v1152, %v922
          %vm1188 = vcmp.lt.s32.totalorder %v1152, %v923
          %vm1189 = vcmp.lt.s32.totalorder %v1153, %v921
          %vm1190 = vcmp.lt.s32.totalorder %v1153, %v922
          %vm1191 = vcmp.lt.s32.totalorder %v1153, %v923
          %vm1192 = vcmp.lt.s32.totalorder %v1154, %v921
          %vm1193 = vcmp.lt.s32.totalorder %v1154, %v922
          %vm1194 = vcmp.lt.s32.totalorder %v1154, %v923
          %vm1195 = vcmp.lt.s32.totalorder %v1155, %v921
          %vm1196 = vcmp.lt.s32.totalorder %v1155, %v922
          %vm1197 = vcmp.lt.s32.totalorder %v1155, %v923
          %vm1198 = vcmp.lt.s32.totalorder %v1156, %v921
          %vm1199 = vcmp.lt.s32.totalorder %v1156, %v922
          %vm1200 = vcmp.lt.s32.totalorder %v1156, %v923
          %vm1201 = vcmp.lt.s32.totalorder %v1157, %v921
          %vm1202 = vcmp.lt.s32.totalorder %v1157, %v922
          %vm1203 = vcmp.lt.s32.totalorder %v1157, %v923
          %vm1204 = vcmp.lt.s32.totalorder %v1158, %v921
          %vm1205 = vcmp.lt.s32.totalorder %v1158, %v922
          %vm1206 = vcmp.lt.s32.totalorder %v1158, %v923
          %vm1207 = vmand %vm1094, %vm1159
          %vm1208 = vmand %vm1095, %vm1160
          %vm1209 = vmand %vm1096, %vm1161
          %vm1210 = vmand %vm1097, %vm1162
          %vm1211 = vmand %vm1098, %vm1163
          %vm1212 = vmand %vm1099, %vm1164
          %vm1213 = vmand %vm1100, %vm1165
          %vm1214 = vmand %vm1101, %vm1166
          %vm1215 = vmand %vm1102, %vm1167
          %vm1216 = vmand %vm1103, %vm1168
          %vm1217 = vmand %vm1104, %vm1169
          %vm1218 = vmand %vm1105, %vm1170
          %vm1219 = vmand %vm1106, %vm1171
          %vm1220 = vmand %vm1107, %vm1172
          %vm1221 = vmand %vm1108, %vm1173
          %vm1222 = vmand %vm1109, %vm1174
          %vm1223 = vmand %vm1110, %vm1175
          %vm1224 = vmand %vm1111, %vm1176
          %vm1225 = vmand %vm1112, %vm1177
          %vm1226 = vmand %vm1113, %vm1178
          %vm1227 = vmand %vm1114, %vm1179
          %vm1228 = vmand %vm1115, %vm1180
          %vm1229 = vmand %vm1116, %vm1181
          %vm1230 = vmand %vm1117, %vm1182
          %vm1231 = vmand %vm1118, %vm1183
          %vm1232 = vmand %vm1119, %vm1184
          %vm1233 = vmand %vm1120, %vm1185
          %vm1234 = vmand %vm1121, %vm1186
          %vm1235 = vmand %vm1122, %vm1187
          %vm1236 = vmand %vm1123, %vm1188
          %vm1237 = vmand %vm1124, %vm1189
          %vm1238 = vmand %vm1125, %vm1190
          %vm1239 = vmand %vm1126, %vm1191
          %vm1240 = vmand %vm1127, %vm1192
          %vm1241 = vmand %vm1128, %vm1193
          %vm1242 = vmand %vm1129, %vm1194
          %vm1243 = vmand %vm1130, %vm1195
          %vm1244 = vmand %vm1131, %vm1196
          %vm1245 = vmand %vm1132, %vm1197
          %vm1246 = vmand %vm1133, %vm1198
          %vm1247 = vmand %vm1134, %vm1199
          %vm1248 = vmand %vm1135, %vm1200
          %vm1249 = vmand %vm1136, %vm1201
          %vm1250 = vmand %vm1137, %vm1202
          %vm1251 = vmand %vm1138, %vm1203
          %vm1252 = vmand %vm1139, %vm1204
          %vm1253 = vmand %vm1140, %vm1205
          %vm1254 = vmand %vm1141, %vm1206
          %vm1255 = vmor %vm1046, %vm1207
          %vm1256 = vmor %vm1047, %vm1208
          %vm1257 = vmor %vm1048, %vm1209
          %vm1258 = vmor %vm1049, %vm1210
          %vm1259 = vmor %vm1050, %vm1211
          %vm1260 = vmor %vm1051, %vm1212
          %vm1261 = vmor %vm1052, %vm1213
          %vm1262 = vmor %vm1053, %vm1214
          %vm1263 = vmor %vm1054, %vm1215
          %vm1264 = vmor %vm1055, %vm1216
          %vm1265 = vmor %vm1056, %vm1217
          %vm1266 = vmor %vm1057, %vm1218
          %vm1267 = vmor %vm1058, %vm1219
          %vm1268 = vmor %vm1059, %vm1220
          %vm1269 = vmor %vm1060, %vm1221
          %vm1270 = vmor %vm1061, %vm1222
          %vm1271 = vmor %vm1062, %vm1223
          %vm1272 = vmor %vm1063, %vm1224
          %vm1273 = vmor %vm1064, %vm1225
          %vm1274 = vmor %vm1065, %vm1226
          %vm1275 = vmor %vm1066, %vm1227
          %vm1276 = vmor %vm1067, %vm1228
          %vm1277 = vmor %vm1068, %vm1229
          %vm1278 = vmor %vm1069, %vm1230
          %vm1279 = vmor %vm1070, %vm1231
          %vm1280 = vmor %vm1071, %vm1232
          %vm1281 = vmor %vm1072, %vm1233
          %vm1282 = vmor %vm1073, %vm1234
          %vm1283 = vmor %vm1074, %vm1235
          %vm1284 = vmor %vm1075, %vm1236
          %vm1285 = vmor %vm1076, %vm1237
          %vm1286 = vmor %vm1077, %vm1238
          %vm1287 = vmor %vm1078, %vm1239
          %vm1288 = vmor %vm1079, %vm1240
          %vm1289 = vmor %vm1080, %vm1241
          %vm1290 = vmor %vm1081, %vm1242
          %vm1291 = vmor %vm1082, %vm1243
          %vm1292 = vmor %vm1083, %vm1244
          %vm1293 = vmor %vm1084, %vm1245
          %vm1294 = vmor %vm1085, %vm1246
          %vm1295 = vmor %vm1086, %vm1247
          %vm1296 = vmor %vm1087, %vm1248
          %vm1297 = vmor %vm1088, %vm1249
          %vm1298 = vmor %vm1089, %vm1250
          %vm1299 = vmor %vm1090, %vm1251
          %vm1300 = vmor %vm1091, %vm1252
          %vm1301 = vmor %vm1092, %vm1253
          %vm1302 = vmor %vm1093, %vm1254
          %v1303 = vsel %vm1255, 1, 0
          %v1304 = vsel %vm1256, 1, 0
          %v1305 = vsel %vm1257, 1, 0
          %v1306 = vsel %vm1258, 1, 0
          %v1307 = vsel %vm1259, 1, 0
          %v1308 = vsel %vm1260, 1, 0
          %v1309 = vsel %vm1261, 1, 0
          %v1310 = vsel %vm1262, 1, 0
          %v1311 = vsel %vm1263, 1, 0
          %v1312 = vsel %vm1264, 1, 0
          %v1313 = vsel %vm1265, 1, 0
          %v1314 = vsel %vm1266, 1, 0
          %v1315 = vsel %vm1267, 1, 0
          %v1316 = vsel %vm1268, 1, 0
          %v1317 = vsel %vm1269, 1, 0
          %v1318 = vsel %vm1270, 1, 0
          %v1319 = vsel %vm1271, 1, 0
          %v1320 = vsel %vm1272, 1, 0
          %v1321 = vsel %vm1273, 1, 0
          %v1322 = vsel %vm1274, 1, 0
          %v1323 = vsel %vm1275, 1, 0
          %v1324 = vsel %vm1276, 1, 0
          %v1325 = vsel %vm1277, 1, 0
          %v1326 = vsel %vm1278, 1, 0
          %v1327 = vsel %vm1279, 1, 0
          %v1328 = vsel %vm1280, 1, 0
          %v1329 = vsel %vm1281, 1, 0
          %v1330 = vsel %vm1282, 1, 0
          %v1331 = vsel %vm1283, 1, 0
          %v1332 = vsel %vm1284, 1, 0
          %v1333 = vsel %vm1285, 1, 0
          %v1334 = vsel %vm1286, 1, 0
          %v1335 = vsel %vm1287, 1, 0
          %v1336 = vsel %vm1288, 1, 0
          %v1337 = vsel %vm1289, 1, 0
          %v1338 = vsel %vm1290, 1, 0
          %v1339 = vsel %vm1291, 1, 0
          %v1340 = vsel %vm1292, 1, 0
          %v1341 = vsel %vm1293, 1, 0
          %v1342 = vsel %vm1294, 1, 0
          %v1343 = vsel %vm1295, 1, 0
          %v1344 = vsel %vm1296, 1, 0
          %v1345 = vsel %vm1297, 1, 0
          %v1346 = vsel %vm1298, 1, 0
          %v1347 = vsel %vm1299, 1, 0
          %v1348 = vsel %vm1300, 1, 0
          %v1349 = vsel %vm1301, 1, 0
          %v1350 = vsel %vm1302, 1, 0
          %v1351 = vadd.s32 %v1303, %v1309
          %v1352 = vadd.s32 %v1306, %v1312
          %v1353 = vadd.s32 %v1351, %v1315
          %v1354 = vadd.s32 %v1352, %v1318
          %v1355 = vadd.s32 %v1353, %v1321
          %v1356 = vadd.s32 %v1354, %v1324
          %v1357 = vadd.s32 %v1355, %v1327
          %v1358 = vadd.s32 %v1356, %v1330
          %v1359 = vadd.s32 %v1357, %v1333
          %v1360 = vadd.s32 %v1358, %v1336
          %v1361 = vadd.s32 %v1359, %v1339
          %v1362 = vadd.s32 %v1360, %v1342
          %v1363 = vadd.s32 %v1361, %v1345
          %v1364 = vadd.s32 %v1362, %v1348
          %v1365 = vadd.s32 %v1363, %v1364
          %v1366 = vrot.slane %v1365, 4
          %v1367 = vadd.s32 %v1365, %v1366
          %v1368 = vrot.slane %v1367, 2
          %v1369 = vadd.s32 %v1367, %v1368
          %v1370 = vrot.slane %v1369, 1
          %v1371 = vadd.s32 %v1369, %v1370
          %v1372 = vadd.s32 %v1304, %v1310
          %v1373 = vadd.s32 %v1307, %v1313
          %v1374 = vadd.s32 %v1372, %v1316
          %v1375 = vadd.s32 %v1373, %v1319
          %v1376 = vadd.s32 %v1374, %v1322
          %v1377 = vadd.s32 %v1375, %v1325
          %v1378 = vadd.s32 %v1376, %v1328
          %v1379 = vadd.s32 %v1377, %v1331
          %v1380 = vadd.s32 %v1378, %v1334
          %v1381 = vadd.s32 %v1379, %v1337
          %v1382 = vadd.s32 %v1380, %v1340
          %v1383 = vadd.s32 %v1381, %v1343
          %v1384 = vadd.s32 %v1382, %v1346
          %v1385 = vadd.s32 %v1383, %v1349
          %v1386 = vadd.s32 %v1384, %v1385
          %v1387 = vrot.slane %v1386, 4
          %v1388 = vadd.s32 %v1386, %v1387
          %v1389 = vrot.slane %v1388, 2
          %v1390 = vadd.s32 %v1388, %v1389
          %v1391 = vrot.slane %v1390, 1
          %v1392 = vadd.s32 %v1390, %v1391
          %v1393 = vadd.s32 %v1305, %v1311
          %v1394 = vadd.s32 %v1308, %v1314
          %v1395 = vadd.s32 %v1393, %v1317
          %v1396 = vadd.s32 %v1394, %v1320
          %v1397 = vadd.s32 %v1395, %v1323
          %v1398 = vadd.s32 %v1396, %v1326
          %v1399 = vadd.s32 %v1397, %v1329
          %v1400 = vadd.s32 %v1398, %v1332
          %v1401 = vadd.s32 %v1399, %v1335
          %v1402 = vadd.s32 %v1400, %v1338
          %v1403 = vadd.s32 %v1401, %v1341
          %v1404 = vadd.s32 %v1402, %v1344
          %v1405 = vadd.s32 %v1403, %v1347
          %v1406 = vadd.s32 %v1404, %v1350
          %v1407 = vadd.s32 %v1405, %v1406
          %v1408 = vrot.slane %v1407, 4
          %v1409 = vadd.s32 %v1407, %v1408
          %v1410 = vrot.slane %v1409, 2
          %v1411 = vadd.s32 %v1409, %v1410
          %v1412 = vrot.slane %v1411, 1
          %v1413 = vadd.s32 %v1411, %v1412
          %v1414 = vadd.s32 %v945, %v1371
          %v1415 = vadd.s32 %v946, %v1392
          %v1416 = vadd.s32 %v947, %v1413
        $region57: #{tpu_custom_call.1} parent=35 // loop_footer
          %s944 = sadd.s32 1, %s940
        $region58: #{tpu_custom_call.1} parent=35 // loop_footer_branch
          %939 = sbr.rel target = $region54
        $region59: #{tpu_custom_call.1} parent=35 // loop_exit
          _
        %s1417 = smul.u32 %s538, 3
        %v1418 = vstv %s1417
        %vm1419 = vcmp.lt.s32.totalorder %v945, %v1418
        %vm1420 = vcmp.lt.s32.totalorder %v946, %v1418
        %vm1421 = vcmp.lt.s32.totalorder %v947, %v1418
        %v1422 = vsel %vm1419, 1, 0
        %v1423 = vsel %vm1420, 1, 0
        %v1424 = vsel %vm1421, 1, 0
        %v1425 = vcombine.low %v1422, %v1423
        %v1427 = vunpack.c.l.s4 1966171168
        %v1428 = vunpack.c.0.s8 %v1427
        %v1429 = vlaneseq
        %v1430 = vshrl.u32 %v1429, 7
        %v1431 = vsub.s32 %v1428, %v1430
        %v1432 = vrot.slane %v1425, %v1431
        %v1434 = vunpack.c.l.s4 1966171168
        %v1435 = vunpack.c.0.s8 %v1434
        %v1436 = vlaneseq
        %v1437 = vshrl.u32 %v1436, 7
        %v1438 = vsub.s32 %v1435, %v1437
        %v1439 = vrot.slane %v1424, %v1438
        %v1440 = vcombine.low %v1432, %v1439
        %v1442 = vunpack.c.l.s4 1966171168
        %v1443 = vunpack.c.0.s8 %v1442
        %v1444 = vlaneseq
        %v1445 = vshrl.u32 %v1444, 7
        %v1446 = vsub.s32 %v1443, %v1445
        %v1447 = vrot.slane %v1440, %v1446
        %vm1448 = vcmp.ne.s32.totalorder %v1447, 0
        %vm1449 = vmor %vm500, %vm1448
        %v1453 = vcombine.low %v497, %v498
        %v1455 = vunpack.c.l.s4 1966171168
        %v1456 = vunpack.c.0.s8 %v1455
        %v1457 = vlaneseq
        %v1458 = vshrl.u32 %v1457, 7
        %v1459 = vsub.s32 %v1456, %v1458
        %v1460 = vrot.slane %v1453, %v1459
        %v1462 = vunpack.c.l.s4 1966171168
        %v1463 = vunpack.c.0.s8 %v1462
        %v1464 = vlaneseq
        %v1465 = vshrl.u32 %v1464, 7
        %v1466 = vsub.s32 %v1463, %v1465
        %v1467 = vrot.slane %v499, %v1466
        %v1468 = vcombine.low %v1460, %v1467
        %v1470 = vunpack.c.l.s4 1966171168
        %v1471 = vunpack.c.0.s8 %v1470
        %v1472 = vlaneseq
        %v1473 = vshrl.u32 %v1472, 7
        %v1474 = vsub.s32 %v1471, %v1473
        %v1475 = vrot.slane %v1468, %v1474
        %v1477 = vsel %vm1449, %v1475, 0.0
        %v1479 = vlaneseq
        %v1480 = vshrl.u32 %v1479, 7
        %v1481 = vsub.s32 0, %v1480
        %v1482 = vrot.slane %v1477, %v1481
        %v1483 = vlaneseq
        %v1484 = vshrl.u32 %v1483, 7
        %v1485 = vsub.s32 1, %v1484
        %v1486 = vrot.slane %v1477, %v1485
        %v1487 = vlaneseq
        %v1488 = vshrl.u32 %v1487, 7
        %v1489 = vsub.s32 2, %v1488
        %v1490 = vrot.slane %v1477, %v1489
        %v1494 = vsel %vm514, %v1482, 0.0
        %v1495 = vsel %vm514, %v1486, 0.0
        %v1496 = vadd.f32 %v1494, %v1495
        %v1497 = vsel %vm514, %v1490, 0.0
        %v1498 = vadd.f32 %v1496, %v1497
        %1499 = vadd.xlane.f32.xlu0 %v1498
        %v1500 = vpop.xlane.xlu0 %1499
        %v1501 = vrot.slane %v1500, 4
        %v1502 = vadd.f32 %v1500, %v1501
        %v1503 = vrot.slane %v1502, 2
        %v1504 = vadd.f32 %v1502, %v1503
        %v1505 = vrot.slane %v1504, 1
        %v1506 = vadd.f32 %v1504, %v1505
        %s1507 = vtos %v1506
        %v1508 = vstv %s625
        %vm1509 = vcmask 0
        %1510 = vst.msk [vmem:[%s387] sm:$0x1] %vm1509, %v1508
        %v1511 = vstv %s1507
        %1512 = vst.msk [vmem:[%s390] sm:$0x1] %vm1509, %v1511
        %s1513 = scvt.s32.f32 %s538
        %v1514 = vstv %s1513
        %1515 = vst.msk [vmem:[%s393] sm:$0x1] %vm1509, %v1514
        %p1516 = scmp.lt.s32.totalorder %s27, 1
        %s1517 = scalar_select %p1516, %s27, 1
        %s1518 = scalar_lea.vmem %s4, %s1517
        %p1519 = scmp.lt.s32.totalorder %s27, 1
        %s1520 = scalar_select %p1519, %s27, 1
        %s1521 = scalar_lea.vmem %s5, %s1520
        %p1522 = scmp.lt.s32.totalorder %s27, 1
        %s1523 = scalar_select %p1522, %s27, 1
        %s1524 = scalar_lea.vmem %s6, %s1523
        // Predicated region
        $region60: #{tpu_custom_call.1} parent=35 // pred_check
          %p1525 = pneg %p149
        $region61: #{tpu_custom_call.1} parent=35 // pred_check_branch
          %1527 = sbr.rel (%p1525) target = $region63
        $region62: #{tpu_custom_call.1} parent=35 // pred_region
          _
        $region63: #{tpu_custom_call.1} parent=35 // pred_fallthru
          _
        // Predicated region
        $region64: #{tpu_custom_call.1} parent=35 // pred_check
          %p1528 = pneg %p175
        $region65: #{tpu_custom_call.1} parent=35 // pred_check_branch
          %1530 = sbr.rel (%p1528) target = $region67
        $region66: #{tpu_custom_call.1} parent=35 // pred_region
          _
        $region67: #{tpu_custom_call.1} parent=35 // pred_fallthru
          _
        // Predicated region
        $region68: #{tpu_custom_call.1} parent=35 // pred_check
          %p1531 = pneg %p201
        $region69: #{tpu_custom_call.1} parent=35 // pred_check_branch
          %1533 = sbr.rel (%p1531) target = $region71
        $region70: #{tpu_custom_call.1} parent=35 // pred_region
          _
        $region71: #{tpu_custom_call.1} parent=35 // pred_fallthru
          _
      $region36: #{tpu_custom_call.1} parent=5 // pred_fallthru
        _
      %p1534 = scmp.le.s32.totalorder 2, %s22
      // Predicated region
      $region72: #{tpu_custom_call.1} parent=5 // pred_check
        %p1535 = pneg %p1534
      $region73: #{tpu_custom_call.1} parent=5 // pred_check_branch
        %1537 = sbr.rel (%p1535) target = $region75
      $region74: #{tpu_custom_call.1} parent=5 // pred_region
        %s1538 = ssub.s32 %s22, 2
        // Predicated region
        $region76: #{tpu_custom_call.1} parent=74 // pred_check
          %p1539 = pneg %p155
        $region77: #{tpu_custom_call.1} parent=74 // pred_check_branch
          %1541 = sbr.rel (%p1539) target = $region79
        $region78: #{tpu_custom_call.1} parent=74 // pred_region
          %p1542 = scmp.lt.s32.totalorder %s28, 1
          %s1543 = scalar_select %p1542, %s28, 1
          %s1544 = scalar_lea.vmem %s4, %s1543
        $region79: #{tpu_custom_call.1} parent=74 // pred_fallthru
          _
        // Predicated region
        $region80: #{tpu_custom_call.1} parent=74 // pred_check
          %p1545 = pneg %p181
        $region81: #{tpu_custom_call.1} parent=74 // pred_check_branch
          %1547 = sbr.rel (%p1545) target = $region83
        $region82: #{tpu_custom_call.1} parent=74 // pred_region
          %p1548 = scmp.lt.s32.totalorder %s28, 1
          %s1549 = scalar_select %p1548, %s28, 1
          %s1550 = scalar_lea.vmem %s5, %s1549
        $region83: #{tpu_custom_call.1} parent=74 // pred_fallthru
          _
        // Predicated region
        $region84: #{tpu_custom_call.1} parent=74 // pred_check
          %p1551 = pneg %p207
        $region85: #{tpu_custom_call.1} parent=74 // pred_check_branch
          %1553 = sbr.rel (%p1551) target = $region87
        $region86: #{tpu_custom_call.1} parent=74 // pred_region
          %p1554 = scmp.lt.s32.totalorder %s28, 1
          %s1555 = scalar_select %p1554, %s28, 1
          %s1556 = scalar_lea.vmem %s6, %s1555
        $region87: #{tpu_custom_call.1} parent=74 // pred_fallthru
          _
      $region75: #{tpu_custom_call.1} parent=5 // pred_fallthru
        _
    $region6: #{tpu_custom_call.1} parent=1 // loop_footer
      %s26 = sadd.s32 1, %s22
    $region7: #{tpu_custom_call.1} parent=1 // loop_footer_branch
      %21 = sbr.rel target = $region3
    $region8: #{tpu_custom_call.1} parent=1 // loop_exit
      _
    %1557 = vsyncpa [#allocation4], 1
    %s1558 = scalar_lea.sflag [#allocation4], 1
    %1559 = vsyncpa %s1558, 1
    %1560 = vsyncpa [#allocation6], 1
    %s1561 = scalar_lea.sflag [#allocation6], 1
    %1562 = vsyncpa %s1561, 1
    %1563 = vsyncpa [#allocation9], 1
    %s1564 = scalar_lea.sflag [#allocation9], 1
    %1565 = vsyncpa %s1564, 1

</llo_original>
